<compile_context>
chip_gen: v6e
topology: v6e:2x2x1
jax: 0.10.0
libtpu: 0.0.40
codegen_flags: <defaults>
</compile_context>

<pallas_src>
import math
import functools

import jax
import jax.numpy as jnp
from jax import lax
from jax.experimental import pallas as pl
from jax.experimental.pallas import tpu as pltpu


# ----------------------------------------------------------------------------
# Fused kernel: one batch element per grid step.
#   Q = x_to @ Wq + bq            (Lq, H)
#   K = x_from @ Wk + bk          (Lk, H)
#   V = x_from @ Wv + bv          (Lk, H)
#   per head h: O_h = softmax(Q_h K_h^T / sqrt(dph)) V_h
#   out = concat_h(O_h) @ W_O + b_O  == sum_h O_h @ W_O[h*dph:(h+1)*dph, :] + b_O
# ----------------------------------------------------------------------------
def _mhca_kernel(xt_ref, xf_ref,
                 wq_ref, bq_ref, wk_ref, bk_ref, wv_ref, bv_ref,
                 wo_ref, bo_ref, o_ref, *, n_heads, dph):
    xt = xt_ref[0]                                    # (Lq, Dt)
    xf = xf_ref[0]                                    # (Lk, Df)
    Lq = xt.shape[0]
    H = n_heads * dph

    # Fused all-head projections (f32 MXU accumulation).
    # NOTE: at production sizes, cast xt/xf (and p below) to bf16 for the MXU
    # fast path while keeping preferred_element_type=f32; kept f32 here so the
    # tiny-shape correctness check stays tight.
    q = jnp.dot(xt, wq_ref[...], preferred_element_type=jnp.float32) + bq_ref[...]
    k = jnp.dot(xf, wk_ref[...], preferred_element_type=jnp.float32) + bk_ref[...]
    v = jnp.dot(xf, wv_ref[...], preferred_element_type=jnp.float32) + bv_ref[...]

    # Fold the 1/sqrt(dph) score scale into Q (Lq x H) instead of scaling each
    # (Lq x Lk) score matrix.
    q = q * (1.0 / math.sqrt(dph))

    # Per-head attention with the output projection fused via accumulation.
    acc = jnp.zeros((Lq, H), jnp.float32)
    for h in range(n_heads):                          # static unroll, n_heads small
        lo = h * dph
        qh = q[:, lo:lo + dph]                        # (Lq, dph)
        kh = k[:, lo:lo + dph]                        # (Lk, dph)
        vh = v[:, lo:lo + dph]                        # (Lk, dph)

        # QK^T as a direct contraction (no materialized transpose of K).
        s = lax.dot_general(qh, kh, (((1,), (1,)), ((), ())),
                            preferred_element_type=jnp.float32)     # (Lq, Lk)
        s = s - jnp.max(s, axis=-1, keepdims=True)
        p = jnp.exp(s)
        # Normalization folded after PV: (Lq,1) EUP reciprocal + (Lq,dph) scale
        # instead of an (Lq,Lk) VALU divide.
        inv = pl.reciprocal(jnp.sum(p, axis=-1, keepdims=True), approx=True)

        head = jnp.dot(p, vh, preferred_element_type=jnp.float32) * inv  # (Lq,dph)
        acc = acc + jnp.dot(head, wo_ref[lo:lo + dph, :],
                            preferred_element_type=jnp.float32)

    o_ref[0] = (acc + bo_ref[...]).astype(o_ref.dtype)


# ----------------------------------------------------------------------------
# Wrapper
# ----------------------------------------------------------------------------
def multi_head_cross_attention(params, x_to, x_from, *, n_heads):
    B, Lq, Dt = x_to.shape
    _, Lk, Df = x_from.shape
    H = params["wq"].shape[1]
    dph = H // n_heads

    itemsize = int(jnp.dtype(x_to.dtype).itemsize)
    flops = int(2 * B * Lq * Dt * H + 4 * B * Lk * Df * H
                + 4 * B * Lq * Lk * H + 2 * B * Lq * H * H)
    transcendentals = int(B * n_heads * Lq * Lk)
    bytes_accessed = int(itemsize * (B * Lq * Dt + B * Lk * Df
                                     + Dt * H + 2 * Df * H + H * H + 4 * H
                                     + B * Lq * H))

    kernel = functools.partial(_mhca_kernel, n_heads=n_heads, dph=dph)

    # Note: for large Lq/Lk, add an "arbitrary" grid axis tiling Lk with an
    # online-softmax accumulator so double-buffered K/V blocks + the (Lq,Lk)
    # f32 scores fit v7x's smaller VMEM; full-sequence blocks are fine here.
    return pl.pallas_call(
        kernel,
        out_shape=jax.ShapeDtypeStruct((B, Lq, H), x_to.dtype),
        grid_spec=pltpu.PrefetchScalarGridSpec(
            num_scalar_prefetch=0,
            grid=(B,),
            in_specs=[
                pl.BlockSpec((1, Lq, Dt), lambda b: (b, 0, 0)),   # x_to
                pl.BlockSpec((1, Lk, Df), lambda b: (b, 0, 0)),   # x_from
                pl.BlockSpec((Dt, H), lambda b: (0, 0)),          # Wq (heads fused)
                pl.BlockSpec((1, H), lambda b: (0, 0)),           # bq
                pl.BlockSpec((Df, H), lambda b: (0, 0)),          # Wk
                pl.BlockSpec((1, H), lambda b: (0, 0)),           # bk
                pl.BlockSpec((Df, H), lambda b: (0, 0)),          # Wv
                pl.BlockSpec((1, H), lambda b: (0, 0)),           # bv
                pl.BlockSpec((H, H), lambda b: (0, 0)),           # Wo
                pl.BlockSpec((1, H), lambda b: (0, 0)),           # bo
            ],
            out_specs=pl.BlockSpec((1, Lq, H), lambda b: (b, 0, 0)),
        ),
        compiler_params=pltpu.CompilerParams(
            dimension_semantics=("parallel",)),   # batch axis → both v7x TCs
        cost_estimate=pl.CostEstimate(
            flops=flops, transcendentals=transcendentals,
            bytes_accessed=bytes_accessed),
    )(x_to, x_from,
      params["wq"], params["bq"], params["wk"], params["bk"],
      params["wv"], params["bv"], params["wo"], params["bo"])


# ----------------------------------------------------------------------------
# Deterministic parameter init (PyTorch Linear style: U(-1/sqrt(fan_in), +)).
# Per-head projection weights are stored fused along the output dim:
#   wq: (x_to_dim, H), wk/wv: (x_from_dim, H), wo: (H, H); biases (1, H).
# ----------------------------------------------------------------------------
def init_params(key, x_to_dim, x_from_dim, hidden_dim, n_heads, dtype=jnp.float32):
    del n_heads  # fused storage; head split happens via slicing
    keys = jax.random.split(key, 8)

    def lin(k, fan_in, shape):
        bound = 1.0 / math.sqrt(fan_in)
        return jax.random.uniform(k, shape, dtype, minval=-bound, maxval=bound)

    H = hidden_dim
    return {
        "wq": lin(keys[0], x_to_dim, (x_to_dim, H)),
        "bq": lin(keys[1], x_to_dim, (1, H)),
        "wk": lin(keys[2], x_from_dim, (x_from_dim, H)),
        "bk": lin(keys[3], x_from_dim, (1, H)),
        "wv": lin(keys[4], x_from_dim, (x_from_dim, H)),
        "bv": lin(keys[5], x_from_dim, (1, H)),
        "wo": lin(keys[6], H, (H, H)),
        "bo": lin(keys[7], H, (1, H)),
    }


# ----------------------------------------------------------------------------
# Pure-JAX reference (mirrors the PyTorch per-head module exactly)
# ----------------------------------------------------------------------------
def reference(params, x_to, x_from, *, n_heads):
    H = params["wq"].shape[1]
    dph = H // n_heads
    outs = []
    for h in range(n_heads):
        sl = slice(h * dph, (h + 1) * dph)
        q = x_to @ params["wq"][:, sl] + params["bq"][:, sl]
        k = x_from @ params["wk"][:, sl] + params["bk"][:, sl]
        v = x_from @ params["wv"][:, sl] + params["bv"][:, sl]
        s = jnp.einsum("bqd,bkd->bqk", q, k) / math.sqrt(dph)
        p = jax.nn.softmax(s, axis=-1)
        outs.append(jnp.einsum("bqk,bkd->bqd", p, v))
    concat = jnp.concatenate(outs, axis=-1)
    return concat @ params["wo"] + params["bo"]


if __name__ == "__main__":
    B = 2
    Lq = 8           # query (x_to) sequence length
    Lk = 8           # key/value (x_from) sequence length
    x_to_dim = 16
    x_from_dim = 12
    hidden_dim = 32
    n_heads = 4

    key = jax.random.PRNGKey(0)
    k_p, k_to, k_from = jax.random.split(key, 3)

    params = init_params(k_p, x_to_dim, x_from_dim, hidden_dim, n_heads)
    x_to = jax.random.normal(k_to, (B, Lq, x_to_dim), jnp.float32)
    x_from = jax.random.normal(k_from, (B, Lk, x_from_dim), jnp.float32)

    out = multi_head_cross_attention(params, x_to, x_from, n_heads=n_heads)
    out = jax.block_until_ready(out)

    ref = reference(params, x_to, x_from, n_heads=n_heads)
    assert out.shape == (B, Lq, hidden_dim)
    # Tolerance relaxed slightly vs. 1e-5 because the softmax denominator uses
    # the approximate EUP reciprocal (pl.reciprocal(approx=True)).
    assert jnp.allclose(out, ref, atol=2e-3, rtol=2e-3), "mismatch vs reference"

    print("KERNEL_OK")
</pallas_src>

<mosaic_0001>
module attributes {stable_mosaic.version = 11 : i64} {
  func.func @_mhca_kernel(%arg0: i32, %arg1: memref<1x8x16xf32, #tpu.memory_space<vmem>>, %arg2: memref<1x8x12xf32, #tpu.memory_space<vmem>>, %arg3: memref<16x32xf32, #tpu.memory_space<vmem>>, %arg4: memref<1x32xf32, #tpu.memory_space<vmem>>, %arg5: memref<12x32xf32, #tpu.memory_space<vmem>>, %arg6: memref<1x32xf32, #tpu.memory_space<vmem>>, %arg7: memref<12x32xf32, #tpu.memory_space<vmem>>, %arg8: memref<1x32xf32, #tpu.memory_space<vmem>>, %arg9: memref<32x32xf32, #tpu.memory_space<vmem>>, %arg10: memref<1x32xf32, #tpu.memory_space<vmem>>, %arg11: memref<1x8x32xf32, #tpu.memory_space<vmem>>) attributes {dimension_semantics = [#tpu.dimension_semantics<parallel>], iteration_bounds = array<i64: 2>, scalar_prefetch = 0 : i64, scratch_operands = 0 : i64, tpu.core_type = #tpu.core_type<tc>, window_params = [{transform_indices = @transform_0, window_bounds = array<i64: 1, 8, 16>}, {transform_indices = @transform_1, window_bounds = array<i64: 1, 8, 12>}, {pipeline_mode = #tpu.pipeline_mode<synchronous>, transform_indices = @transform_2, window_bounds = array<i64: 16, 32>}, {pipeline_mode = #tpu.pipeline_mode<synchronous>, transform_indices = @transform_3, window_bounds = array<i64: 1, 32>}, {pipeline_mode = #tpu.pipeline_mode<synchronous>, transform_indices = @transform_4, window_bounds = array<i64: 12, 32>}, {pipeline_mode = #tpu.pipeline_mode<synchronous>, transform_indices = @transform_5, window_bounds = array<i64: 1, 32>}, {pipeline_mode = #tpu.pipeline_mode<synchronous>, transform_indices = @transform_6, window_bounds = array<i64: 12, 32>}, {pipeline_mode = #tpu.pipeline_mode<synchronous>, transform_indices = @transform_7, window_bounds = array<i64: 1, 32>}, {pipeline_mode = #tpu.pipeline_mode<synchronous>, transform_indices = @transform_8, window_bounds = array<i64: 32, 32>}, {pipeline_mode = #tpu.pipeline_mode<synchronous>, transform_indices = @transform_9, window_bounds = array<i64: 1, 32>}, {transform_indices = @transform_10, window_bounds = array<i64: 1, 8, 32>}]} {
    %c0 = arith.constant 0 : index
    %c0_0 = arith.constant 0 : index
    %c0_1 = arith.constant 0 : index
    %0 = vector.load %arg1[%c0, %c0_0, %c0_1] : memref<1x8x16xf32, #tpu.memory_space<vmem>>, vector<1x8x16xf32>
    %1 = vector.shape_cast %0 : vector<1x8x16xf32> to vector<8x16xf32>
    %c0_2 = arith.constant 0 : index
    %c0_3 = arith.constant 0 : index
    %c0_4 = arith.constant 0 : index
    %2 = vector.load %arg2[%c0_2, %c0_3, %c0_4] : memref<1x8x12xf32, #tpu.memory_space<vmem>>, vector<1x8x12xf32>
    %3 = vector.shape_cast %2 : vector<1x8x12xf32> to vector<8x12xf32>
    %c0_5 = arith.constant 0 : index
    %c0_6 = arith.constant 0 : index
    %4 = vector.load %arg3[%c0_5, %c0_6] : memref<16x32xf32, #tpu.memory_space<vmem>>, vector<16x32xf32>
    %cst = arith.constant dense<0.000000e+00> : vector<8x32xf32>
    %5 = tpu.matmul %1, %4, %cst {dimension_numbers = #tpu.dot_dimension_numbers<[1], [0], [0], [1], [0, 0, 1, 1], [], []>} : vector<8x16xf32>, vector<16x32xf32>, vector<8x32xf32> -> vector<8x32xf32>
    %c0_7 = arith.constant 0 : index
    %c0_8 = arith.constant 0 : index
    %6 = vector.load %arg4[%c0_7, %c0_8] : memref<1x32xf32, #tpu.memory_space<vmem>>, vector<1x32xf32>
    %7 = vector.broadcast %6 : vector<1x32xf32> to vector<8x32xf32>
    %8 = arith.addf %5, %7 : vector<8x32xf32>
    %c0_9 = arith.constant 0 : index
    %c0_10 = arith.constant 0 : index
    %9 = vector.load %arg5[%c0_9, %c0_10] : memref<12x32xf32, #tpu.memory_space<vmem>>, vector<12x32xf32>
    %cst_11 = arith.constant dense<0.000000e+00> : vector<8x32xf32>
    %10 = tpu.matmul %3, %9, %cst_11 {dimension_numbers = #tpu.dot_dimension_numbers<[1], [0], [0], [1], [0, 0, 1, 1], [], []>} : vector<8x12xf32>, vector<12x32xf32>, vector<8x32xf32> -> vector<8x32xf32>
    %c0_12 = arith.constant 0 : index
    %c0_13 = arith.constant 0 : index
    %11 = vector.load %arg6[%c0_12, %c0_13] : memref<1x32xf32, #tpu.memory_space<vmem>>, vector<1x32xf32>
    %12 = vector.broadcast %11 : vector<1x32xf32> to vector<8x32xf32>
    %13 = arith.addf %10, %12 : vector<8x32xf32>
    %c0_14 = arith.constant 0 : index
    %c0_15 = arith.constant 0 : index
    %14 = vector.load %arg7[%c0_14, %c0_15] : memref<12x32xf32, #tpu.memory_space<vmem>>, vector<12x32xf32>
    %cst_16 = arith.constant dense<0.000000e+00> : vector<8x32xf32>
    %15 = tpu.matmul %3, %14, %cst_16 {dimension_numbers = #tpu.dot_dimension_numbers<[1], [0], [0], [1], [0, 0, 1, 1], [], []>} : vector<8x12xf32>, vector<12x32xf32>, vector<8x32xf32> -> vector<8x32xf32>
    %c0_17 = arith.constant 0 : index
    %c0_18 = arith.constant 0 : index
    %16 = vector.load %arg8[%c0_17, %c0_18] : memref<1x32xf32, #tpu.memory_space<vmem>>, vector<1x32xf32>
    %17 = vector.broadcast %16 : vector<1x32xf32> to vector<8x32xf32>
    %18 = arith.addf %15, %17 : vector<8x32xf32>
    %cst_19 = arith.constant 0.353553385 : f32
    %19 = vector.broadcast %cst_19 : f32 to vector<8x32xf32>
    %20 = arith.mulf %8, %19 : vector<8x32xf32>
    %cst_20 = arith.constant 0.000000e+00 : f32
    %21 = vector.broadcast %cst_20 : f32 to vector<8x32xf32>
    %22 = vector.extract_strided_slice %20 {offsets = [0, 0], sizes = [8, 8], strides = [1, 1]} : vector<8x32xf32> to vector<8x8xf32>
    %23 = vector.extract_strided_slice %13 {offsets = [0, 0], sizes = [8, 8], strides = [1, 1]} : vector<8x32xf32> to vector<8x8xf32>
    %24 = vector.extract_strided_slice %18 {offsets = [0, 0], sizes = [8, 8], strides = [1, 1]} : vector<8x32xf32> to vector<8x8xf32>
    %cst_21 = arith.constant dense<0.000000e+00> : vector<8x8xf32>
    %25 = tpu.matmul %22, %23, %cst_21 {dimension_numbers = #tpu.dot_dimension_numbers<[1], [1], [0], [0], [0, 0, 1, 0], [], []>} : vector<8x8xf32>, vector<8x8xf32>, vector<8x8xf32> -> vector<8x8xf32>
    %cst_22 = arith.constant dense<0xFF800000> : vector<8xf32>
    %26 = vector.multi_reduction <maximumf>, %25, %cst_22 [1] : vector<8x8xf32> to vector<8xf32>
    %27 = vector.shape_cast %26 : vector<8xf32> to vector<8x1xf32>
    %28 = vector.broadcast %27 : vector<8x1xf32> to vector<8x8xf32>
    %29 = arith.subf %25, %28 : vector<8x8xf32>
    %30 = math.exp %29 : vector<8x8xf32>
    %cst_23 = arith.constant dense<0.000000e+00> : vector<8xf32>
    %31 = vector.multi_reduction <add>, %30, %cst_23 [1] : vector<8x8xf32> to vector<8xf32>
    %32 = vector.shape_cast %31 : vector<8xf32> to vector<8x1xf32>
    %33 = tpu.reciprocal %32 {approx = true} : vector<8x1xf32> -> vector<8x1xf32>
    %cst_24 = arith.constant dense<0.000000e+00> : vector<8x8xf32>
    %34 = tpu.matmul %30, %24, %cst_24 {dimension_numbers = #tpu.dot_dimension_numbers<[1], [0], [0], [1], [0, 0, 1, 1], [], []>} : vector<8x8xf32>, vector<8x8xf32>, vector<8x8xf32> -> vector<8x8xf32>
    %35 = vector.broadcast %33 : vector<8x1xf32> to vector<8x8xf32>
    %36 = arith.mulf %34, %35 : vector<8x8xf32>
    %c0_25 = arith.constant 0 : index
    %c0_26 = arith.constant 0 : index
    %37 = vector.load %arg9[%c0_25, %c0_26] : memref<32x32xf32, #tpu.memory_space<vmem>>, vector<8x32xf32>
    %cst_27 = arith.constant dense<0.000000e+00> : vector<8x32xf32>
    %38 = tpu.matmul %36, %37, %cst_27 {dimension_numbers = #tpu.dot_dimension_numbers<[1], [0], [0], [1], [0, 0, 1, 1], [], []>} : vector<8x8xf32>, vector<8x32xf32>, vector<8x32xf32> -> vector<8x32xf32>
    %39 = arith.addf %21, %38 : vector<8x32xf32>
    %40 = vector.extract_strided_slice %20 {offsets = [0, 8], sizes = [8, 8], strides = [1, 1]} : vector<8x32xf32> to vector<8x8xf32>
    %41 = vector.extract_strided_slice %13 {offsets = [0, 8], sizes = [8, 8], strides = [1, 1]} : vector<8x32xf32> to vector<8x8xf32>
    %42 = vector.extract_strided_slice %18 {offsets = [0, 8], sizes = [8, 8], strides = [1, 1]} : vector<8x32xf32> to vector<8x8xf32>
    %cst_28 = arith.constant dense<0.000000e+00> : vector<8x8xf32>
    %43 = tpu.matmul %40, %41, %cst_28 {dimension_numbers = #tpu.dot_dimension_numbers<[1], [1], [0], [0], [0, 0, 1, 0], [], []>} : vector<8x8xf32>, vector<8x8xf32>, vector<8x8xf32> -> vector<8x8xf32>
    %cst_29 = arith.constant dense<0xFF800000> : vector<8xf32>
    %44 = vector.multi_reduction <maximumf>, %43, %cst_29 [1] : vector<8x8xf32> to vector<8xf32>
    %45 = vector.shape_cast %44 : vector<8xf32> to vector<8x1xf32>
    %46 = vector.broadcast %45 : vector<8x1xf32> to vector<8x8xf32>
    %47 = arith.subf %43, %46 : vector<8x8xf32>
    %48 = math.exp %47 : vector<8x8xf32>
    %cst_30 = arith.constant dense<0.000000e+00> : vector<8xf32>
    %49 = vector.multi_reduction <add>, %48, %cst_30 [1] : vector<8x8xf32> to vector<8xf32>
    %50 = vector.shape_cast %49 : vector<8xf32> to vector<8x1xf32>
    %51 = tpu.reciprocal %50 {approx = true} : vector<8x1xf32> -> vector<8x1xf32>
    %cst_31 = arith.constant dense<0.000000e+00> : vector<8x8xf32>
    %52 = tpu.matmul %48, %42, %cst_31 {dimension_numbers = #tpu.dot_dimension_numbers<[1], [0], [0], [1], [0, 0, 1, 1], [], []>} : vector<8x8xf32>, vector<8x8xf32>, vector<8x8xf32> -> vector<8x8xf32>
    %53 = vector.broadcast %51 : vector<8x1xf32> to vector<8x8xf32>
    %54 = arith.mulf %52, %53 : vector<8x8xf32>
    %c8 = arith.constant 8 : index
    %c0_32 = arith.constant 0 : index
    %55 = vector.load %arg9[%c8, %c0_32] : memref<32x32xf32, #tpu.memory_space<vmem>>, vector<8x32xf32>
    %cst_33 = arith.constant dense<0.000000e+00> : vector<8x32xf32>
    %56 = tpu.matmul %54, %55, %cst_33 {dimension_numbers = #tpu.dot_dimension_numbers<[1], [0], [0], [1], [0, 0, 1, 1], [], []>} : vector<8x8xf32>, vector<8x32xf32>, vector<8x32xf32> -> vector<8x32xf32>
    %57 = arith.addf %39, %56 : vector<8x32xf32>
    %58 = vector.extract_strided_slice %20 {offsets = [0, 16], sizes = [8, 8], strides = [1, 1]} : vector<8x32xf32> to vector<8x8xf32>
    %59 = vector.extract_strided_slice %13 {offsets = [0, 16], sizes = [8, 8], strides = [1, 1]} : vector<8x32xf32> to vector<8x8xf32>
    %60 = vector.extract_strided_slice %18 {offsets = [0, 16], sizes = [8, 8], strides = [1, 1]} : vector<8x32xf32> to vector<8x8xf32>
    %cst_34 = arith.constant dense<0.000000e+00> : vector<8x8xf32>
    %61 = tpu.matmul %58, %59, %cst_34 {dimension_numbers = #tpu.dot_dimension_numbers<[1], [1], [0], [0], [0, 0, 1, 0], [], []>} : vector<8x8xf32>, vector<8x8xf32>, vector<8x8xf32> -> vector<8x8xf32>
    %cst_35 = arith.constant dense<0xFF800000> : vector<8xf32>
    %62 = vector.multi_reduction <maximumf>, %61, %cst_35 [1] : vector<8x8xf32> to vector<8xf32>
    %63 = vector.shape_cast %62 : vector<8xf32> to vector<8x1xf32>
    %64 = vector.broadcast %63 : vector<8x1xf32> to vector<8x8xf32>
    %65 = arith.subf %61, %64 : vector<8x8xf32>
    %66 = math.exp %65 : vector<8x8xf32>
    %cst_36 = arith.constant dense<0.000000e+00> : vector<8xf32>
    %67 = vector.multi_reduction <add>, %66, %cst_36 [1] : vector<8x8xf32> to vector<8xf32>
    %68 = vector.shape_cast %67 : vector<8xf32> to vector<8x1xf32>
    %69 = tpu.reciprocal %68 {approx = true} : vector<8x1xf32> -> vector<8x1xf32>
    %cst_37 = arith.constant dense<0.000000e+00> : vector<8x8xf32>
    %70 = tpu.matmul %66, %60, %cst_37 {dimension_numbers = #tpu.dot_dimension_numbers<[1], [0], [0], [1], [0, 0, 1, 1], [], []>} : vector<8x8xf32>, vector<8x8xf32>, vector<8x8xf32> -> vector<8x8xf32>
    %71 = vector.broadcast %69 : vector<8x1xf32> to vector<8x8xf32>
    %72 = arith.mulf %70, %71 : vector<8x8xf32>
    %c16 = arith.constant 16 : index
    %c0_38 = arith.constant 0 : index
    %73 = vector.load %arg9[%c16, %c0_38] : memref<32x32xf32, #tpu.memory_space<vmem>>, vector<8x32xf32>
    %cst_39 = arith.constant dense<0.000000e+00> : vector<8x32xf32>
    %74 = tpu.matmul %72, %73, %cst_39 {dimension_numbers = #tpu.dot_dimension_numbers<[1], [0], [0], [1], [0, 0, 1, 1], [], []>} : vector<8x8xf32>, vector<8x32xf32>, vector<8x32xf32> -> vector<8x32xf32>
    %75 = arith.addf %57, %74 : vector<8x32xf32>
    %76 = vector.extract_strided_slice %20 {offsets = [0, 24], sizes = [8, 8], strides = [1, 1]} : vector<8x32xf32> to vector<8x8xf32>
    %77 = vector.extract_strided_slice %13 {offsets = [0, 24], sizes = [8, 8], strides = [1, 1]} : vector<8x32xf32> to vector<8x8xf32>
    %78 = vector.extract_strided_slice %18 {offsets = [0, 24], sizes = [8, 8], strides = [1, 1]} : vector<8x32xf32> to vector<8x8xf32>
    %cst_40 = arith.constant dense<0.000000e+00> : vector<8x8xf32>
    %79 = tpu.matmul %76, %77, %cst_40 {dimension_numbers = #tpu.dot_dimension_numbers<[1], [1], [0], [0], [0, 0, 1, 0], [], []>} : vector<8x8xf32>, vector<8x8xf32>, vector<8x8xf32> -> vector<8x8xf32>
    %cst_41 = arith.constant dense<0xFF800000> : vector<8xf32>
    %80 = vector.multi_reduction <maximumf>, %79, %cst_41 [1] : vector<8x8xf32> to vector<8xf32>
    %81 = vector.shape_cast %80 : vector<8xf32> to vector<8x1xf32>
    %82 = vector.broadcast %81 : vector<8x1xf32> to vector<8x8xf32>
    %83 = arith.subf %79, %82 : vector<8x8xf32>
    %84 = math.exp %83 : vector<8x8xf32>
    %cst_42 = arith.constant dense<0.000000e+00> : vector<8xf32>
    %85 = vector.multi_reduction <add>, %84, %cst_42 [1] : vector<8x8xf32> to vector<8xf32>
    %86 = vector.shape_cast %85 : vector<8xf32> to vector<8x1xf32>
    %87 = tpu.reciprocal %86 {approx = true} : vector<8x1xf32> -> vector<8x1xf32>
    %cst_43 = arith.constant dense<0.000000e+00> : vector<8x8xf32>
    %88 = tpu.matmul %84, %78, %cst_43 {dimension_numbers = #tpu.dot_dimension_numbers<[1], [0], [0], [1], [0, 0, 1, 1], [], []>} : vector<8x8xf32>, vector<8x8xf32>, vector<8x8xf32> -> vector<8x8xf32>
    %89 = vector.broadcast %87 : vector<8x1xf32> to vector<8x8xf32>
    %90 = arith.mulf %88, %89 : vector<8x8xf32>
    %c24 = arith.constant 24 : index
    %c0_44 = arith.constant 0 : index
    %91 = vector.load %arg9[%c24, %c0_44] : memref<32x32xf32, #tpu.memory_space<vmem>>, vector<8x32xf32>
    %cst_45 = arith.constant dense<0.000000e+00> : vector<8x32xf32>
    %92 = tpu.matmul %90, %91, %cst_45 {dimension_numbers = #tpu.dot_dimension_numbers<[1], [0], [0], [1], [0, 0, 1, 1], [], []>} : vector<8x8xf32>, vector<8x32xf32>, vector<8x32xf32> -> vector<8x32xf32>
    %93 = arith.addf %75, %92 : vector<8x32xf32>
    %c0_46 = arith.constant 0 : index
    %c0_47 = arith.constant 0 : index
    %94 = vector.load %arg10[%c0_46, %c0_47] : memref<1x32xf32, #tpu.memory_space<vmem>>, vector<1x32xf32>
    %95 = vector.broadcast %94 : vector<1x32xf32> to vector<8x32xf32>
    %96 = arith.addf %93, %95 : vector<8x32xf32>
    %c0_48 = arith.constant 0 : index
    %c0_49 = arith.constant 0 : index
    %c0_50 = arith.constant 0 : index
    %97 = vector.load %arg11[%c0_48, %c0_49, %c0_50] : memref<1x8x32xf32, #tpu.memory_space<vmem>>, vector<1x8x32xf32>
    %98 = vector.shape_cast %97 : vector<1x8x32xf32> to vector<8x32xf32>
    %99 = vector.shape_cast %96 : vector<8x32xf32> to vector<1x8x32xf32>
    tpu.vector_store %arg11[%c0_48, %c0_49, %c0_50], %99 {strides = array<i32>} : memref<1x8x32xf32, #tpu.memory_space<vmem>>, vector<1x8x32xf32>,
    return
  }
  func.func @transform_0(%arg0: i32) -> (i32, i32, i32) {
    %c0_i32 = arith.constant 0 : i32
    %c0_i32_0 = arith.constant 0 : i32
    %c0_i32_1 = arith.constant 0 : i32
    return %arg0, %c0_i32, %c0_i32_0 : i32, i32, i32
  }
  func.func @transform_1(%arg0: i32) -> (i32, i32, i32) {
    %c0_i32 = arith.constant 0 : i32
    %c0_i32_0 = arith.constant 0 : i32
    %c0_i32_1 = arith.constant 0 : i32
    return %arg0, %c0_i32, %c0_i32_0 : i32, i32, i32
  }
  func.func @transform_2(%arg0: i32) -> (i32, i32) {
    %c0_i32 = arith.constant 0 : i32
    %c0_i32_0 = arith.constant 0 : i32
    %c0_i32_1 = arith.constant 0 : i32
    return %c0_i32, %c0_i32_0 : i32, i32
  }
  func.func @transform_3(%arg0: i32) -> (i32, i32) {
    %c0_i32 = arith.constant 0 : i32
    %c0_i32_0 = arith.constant 0 : i32
    %c0_i32_1 = arith.constant 0 : i32
    return %c0_i32, %c0_i32_0 : i32, i32
  }
  func.func @transform_4(%arg0: i32) -> (i32, i32) {
    %c0_i32 = arith.constant 0 : i32
    %c0_i32_0 = arith.constant 0 : i32
    %c0_i32_1 = arith.constant 0 : i32
    return %c0_i32, %c0_i32_0 : i32, i32
  }
  func.func @transform_5(%arg0: i32) -> (i32, i32) {
    %c0_i32 = arith.constant 0 : i32
    %c0_i32_0 = arith.constant 0 : i32
    %c0_i32_1 = arith.constant 0 : i32
    return %c0_i32, %c0_i32_0 : i32, i32
  }
  func.func @transform_6(%arg0: i32) -> (i32, i32) {
    %c0_i32 = arith.constant 0 : i32
    %c0_i32_0 = arith.constant 0 : i32
    %c0_i32_1 = arith.constant 0 : i32
    return %c0_i32, %c0_i32_0 : i32, i32
  }
  func.func @transform_7(%arg0: i32) -> (i32, i32) {
    %c0_i32 = arith.constant 0 : i32
    %c0_i32_0 = arith.constant 0 : i32
    %c0_i32_1 = arith.constant 0 : i32
    return %c0_i32, %c0_i32_0 : i32, i32
  }
  func.func @transform_8(%arg0: i32) -> (i32, i32) {
    %c0_i32 = arith.constant 0 : i32
    %c0_i32_0 = arith.constant 0 : i32
    %c0_i32_1 = arith.constant 0 : i32
    return %c0_i32, %c0_i32_0 : i32, i32
  }
  func.func @transform_9(%arg0: i32) -> (i32, i32) {
    %c0_i32 = arith.constant 0 : i32
    %c0_i32_0 = arith.constant 0 : i32
    %c0_i32_1 = arith.constant 0 : i32
    return %c0_i32, %c0_i32_0 : i32, i32
  }
  func.func @transform_10(%arg0: i32) -> (i32, i32, i32) {
    %c0_i32 = arith.constant 0 : i32
    %c0_i32_0 = arith.constant 0 : i32
    %c0_i32_1 = arith.constant 0 : i32
    return %arg0, %c0_i32, %c0_i32_0 : i32, i32, i32
  }
}

</mosaic_0001>

<llo_original>
// kernel: tpu_custom_call.1
$region0: #{tpu_custom_call.1}
  #allocation0 [shape = 'u32[]', space=smem, size = 0x4, offset = 0x4, fixed_abs, tag = 'smem constant byte address 0x4 - core index']
  #allocation1 [shape = 'u32[144,128]{1,0:T(1,128)}', space=vmem, size = 0x12000, scoped, tag = 'internal scratch']
  %s0 = inlined_call_operand.hbm [shape: f32[2,8,16], index: 0, kind: input, shape index: {}]
  %s1 = inlined_call_operand.hbm [shape: f32[2,8,12], index: 1, kind: input, shape index: {}]
  %s2 = inlined_call_operand.hbm [shape: f32[16,32], index: 2, kind: input, shape index: {}]
  %s3 = inlined_call_operand.vmem [shape: f32[1,32], index: 3, kind: input, shape index: {}]
  %s4 = inlined_call_operand.hbm [shape: f32[12,32], index: 4, kind: input, shape index: {}]
  %s5 = inlined_call_operand.vmem [shape: f32[1,32], index: 5, kind: input, shape index: {}]
  %s6 = inlined_call_operand.hbm [shape: f32[12,32], index: 6, kind: input, shape index: {}]
  %s7 = inlined_call_operand.vmem [shape: f32[1,32], index: 7, kind: input, shape index: {}]
  %s8 = inlined_call_operand.hbm [shape: f32[32,32], index: 8, kind: input, shape index: {}]
  %s9 = inlined_call_operand.vmem [shape: f32[1,32], index: 9, kind: input, shape index: {}]
  %s10 = inlined_call_operand.hbm [shape: f32[2,8,32], index: 10, kind: output, shape index: {}]
  %s11 = sld [smem:[#allocation0]]
  $region97: #{tpu_custom_call.1} parent=0
    _
  %s13 = ssub.s32 1, %s11
  %s14 = scalar_select 0, %s13, %s11
  $region1: #{tpu_custom_call.1} parent=0
    #allocation2 [shape = 'u8[8192]{0}', space=vmem, size = 0x2000, scoped, tag = 'input window, operand 0']
    #allocation3 [shape = 's32[2]{0}', space=sflag, size = 0x8, scoped, tag = 'scoped memory for tpu_custom_call.1']
    #allocation4 [shape = 's32[2]{0}', space=sflag, size = 0x8, scoped, tag = 'scoped memory for tpu_custom_call.1']
    #allocation5 [shape = 'u8[8192]{0}', space=vmem, size = 0x2000, scoped, tag = 'input window, operand 1']
    #allocation6 [shape = 's32[2]{0}', space=sflag, size = 0x8, scoped, tag = 'scoped memory for tpu_custom_call.1']
    #allocation7 [shape = 'u8[8192]{0}', space=vmem, size = 0x2000, scoped, tag = 'input window, operand 2, single buffered']
    #allocation8 [shape = 'u8[8192]{0}', space=vmem, size = 0x2000, scoped, tag = 'input window, operand 4, single buffered']
    #allocation9 [shape = 's32[1]{0}', space=sflag, size = 0x4, scoped, tag = 'scoped memory for tpu_custom_call.1']
    #allocation10 [shape = 'u8[8192]{0}', space=vmem, size = 0x2000, scoped, tag = 'input window, operand 6, single buffered']
    #allocation11 [shape = 'u8[16384]{0}', space=vmem, size = 0x4000, scoped, tag = 'input window, operand 8, single buffered']
    #allocation12 [shape = 's32[1]{0}', space=sflag, size = 0x4, scoped, tag = 'scoped memory for tpu_custom_call.1']
    #allocation13 [shape = 'u8[8192]{0}', space=vmem, size = 0x2000, scoped, tag = 'output window, operand 0']
    %15 = vsyncpa [#allocation3], 0
    %s16 = scalar_lea.sflag [#allocation3], 1
    %17 = vsyncpa %s16, 0
    %18 = vsyncpa [#allocation6], 0
    %s19 = scalar_lea.sflag [#allocation6], 1
    %20 = vsyncpa %s19, 0
    %21 = vsyncpa [#allocation9], 0
    %22 = vsyncpa [#allocation12], 0
    %23 = vsyncpa [#allocation4], 0
    %s24 = scalar_lea.sflag [#allocation4], 1
    %25 = vsyncpa %s24, 0
    loop: start=0, step=1, limit=4
    $region2: #{tpu_custom_call.1} parent=1 // loop_pre_header
      _
    $region3: #{tpu_custom_call.1} parent=1 // loop_header
      %s27 = sphi 0, %s31
      %p28 = scmp.ge.s32.totalorder %s27, 4
      %s37 = sphi 0, %s39
      %s40 = sphi 0, %s37
      %s41 = sphi 0, %s40
      %s57 = sphi 0, %s41
      %s63 = sphi 0, %s65
      %s66 = sphi 0, %s63
      %s67 = sphi 0, %s66
      %s83 = sphi 0, %s67
      %s87 = sphi 0, %s87
      %s89 = sphi 0, %s87
      %s90 = sphi 0, %s89
      %s104 = sphi 0, %s90
      %s108 = sphi 0, %s108
      %s110 = sphi 0, %s108
      %s111 = sphi 0, %s110
      %s125 = sphi 0, %s111
      %s129 = sphi 0, %s129
      %s131 = sphi 0, %s129
      %s132 = sphi 0, %s131
      %s146 = sphi 0, %s132
      %s150 = sphi 0, %s150
      %s152 = sphi 0, %s150
      %s153 = sphi 0, %s152
      %s167 = sphi 0, %s153
      %s171 = sphi 0, %s171
      %s173 = sphi 0, %s171
      %s174 = sphi 0, %s173
      %s188 = sphi 0, %s174
      %s192 = sphi 0, %s192
      %s194 = sphi 0, %s192
      %s195 = sphi 0, %s194
      %s209 = sphi 0, %s195
      %s213 = sphi 0, %s213
      %s215 = sphi 0, %s213
      %s216 = sphi 0, %s215
      %s230 = sphi 0, %s216
      %s234 = sphi 0, %s234
      %s236 = sphi 0, %s234
      %s237 = sphi 0, %s236
      %s251 = sphi 0, %s237
      %s257 = sphi 0, %s259
      %s260 = sphi 0, %s257
      %s261 = sphi 0, %s260
      %s277 = sphi 0, %s261
    $region4: #{tpu_custom_call.1} parent=1 // loop_header_branch
      %30 = sbr.rel (%p28) target = $region8
    $region5: #{tpu_custom_call.1} parent=1 // loop_body
      %s32 = ssub.s32 %s27, 1
      %s33 = ssub.s32 %s27, 2
      %s34 = sadd.s32 %s27, 1
      %s35 = ssub.s32 %s27, %s34
      %p36 = scmp.eq.s32.totalorder %s35, 0
      %s38 = sadd.s32 %s37, 1
      %s39 = scalar_select %p36, %s37, %s38
      %p42 = pneg %p36
      %p43 = scmp.eq.s32.totalorder %s27, 1
      %p44 = por %p42, %p43
      %p45 = scmp.ne.s32.totalorder %s37, %s40
      %p46 = scmp.eq.s32.totalorder %s27, 0
      %p47 = por %p45, %p46
      %p48 = scmp.ne.s32.totalorder %s37, %s40
      %p49 = scmp.eq.s32.totalorder %s32, 1
      %p50 = por %p48, %p49
      %p51 = scmp.ne.s32.totalorder %s40, %s41
      %p52 = scmp.eq.s32.totalorder %s32, 0
      %p53 = por %p51, %p52
      %p54 = scmp.ne.s32.totalorder %s40, %s41
      %p55 = scmp.eq.s32.totalorder %s33, 1
      %p56 = por %p54, %p55
      %p58 = scmp.ne.s32.totalorder %s41, %s57
      %p59 = scmp.eq.s32.totalorder %s33, 0
      %p60 = por %p58, %p59
      %s61 = ssub.s32 %s27, %s34
      %p62 = scmp.eq.s32.totalorder %s61, 0
      %s64 = sadd.s32 %s63, 1
      %s65 = scalar_select %p62, %s63, %s64
      %p68 = pneg %p62
      %p69 = scmp.eq.s32.totalorder %s27, 1
      %p70 = por %p68, %p69
      %p71 = scmp.ne.s32.totalorder %s63, %s66
      %p72 = scmp.eq.s32.totalorder %s27, 0
      %p73 = por %p71, %p72
      %p74 = scmp.ne.s32.totalorder %s63, %s66
      %p75 = scmp.eq.s32.totalorder %s32, 1
      %p76 = por %p74, %p75
      %p77 = scmp.ne.s32.totalorder %s66, %s67
      %p78 = scmp.eq.s32.totalorder %s32, 0
      %p79 = por %p77, %p78
      %p80 = scmp.ne.s32.totalorder %s66, %s67
      %p81 = scmp.eq.s32.totalorder %s33, 1
      %p82 = por %p80, %p81
      %p84 = scmp.ne.s32.totalorder %s67, %s83
      %p85 = scmp.eq.s32.totalorder %s33, 0
      %p86 = por %p84, %p85
      %s88 = sadd.s32 %s87, 1
      %p91 = scmp.eq.s32.totalorder %s27, 1
      %p92 = scmp.ne.s32.totalorder %s87, %s89
      %p93 = scmp.eq.s32.totalorder %s27, 0
      %p94 = por %p92, %p93
      %p95 = scmp.ne.s32.totalorder %s87, %s89
      %p96 = scmp.eq.s32.totalorder %s32, 1
      %p97 = por %p95, %p96
      %p98 = scmp.ne.s32.totalorder %s89, %s90
      %p99 = scmp.eq.s32.totalorder %s32, 0
      %p100 = por %p98, %p99
      %p101 = scmp.ne.s32.totalorder %s89, %s90
      %p102 = scmp.eq.s32.totalorder %s33, 1
      %p103 = por %p101, %p102
      %p105 = scmp.ne.s32.totalorder %s90, %s104
      %p106 = scmp.eq.s32.totalorder %s33, 0
      %p107 = por %p105, %p106
      %s109 = sadd.s32 %s108, 1
      %p112 = scmp.eq.s32.totalorder %s27, 1
      %p113 = scmp.ne.s32.totalorder %s108, %s110
      %p114 = scmp.eq.s32.totalorder %s27, 0
      %p115 = por %p113, %p114
      %p116 = scmp.ne.s32.totalorder %s108, %s110
      %p117 = scmp.eq.s32.totalorder %s32, 1
      %p118 = por %p116, %p117
      %p119 = scmp.ne.s32.totalorder %s110, %s111
      %p120 = scmp.eq.s32.totalorder %s32, 0
      %p121 = por %p119, %p120
      %p122 = scmp.ne.s32.totalorder %s110, %s111
      %p123 = scmp.eq.s32.totalorder %s33, 1
      %p124 = por %p122, %p123
      %p126 = scmp.ne.s32.totalorder %s111, %s125
      %p127 = scmp.eq.s32.totalorder %s33, 0
      %p128 = por %p126, %p127
      %s130 = sadd.s32 %s129, 1
      %p133 = scmp.eq.s32.totalorder %s27, 1
      %p134 = scmp.ne.s32.totalorder %s129, %s131
      %p135 = scmp.eq.s32.totalorder %s27, 0
      %p136 = por %p134, %p135
      %p137 = scmp.ne.s32.totalorder %s129, %s131
      %p138 = scmp.eq.s32.totalorder %s32, 1
      %p139 = por %p137, %p138
      %p140 = scmp.ne.s32.totalorder %s131, %s132
      %p141 = scmp.eq.s32.totalorder %s32, 0
      %p142 = por %p140, %p141
      %p143 = scmp.ne.s32.totalorder %s131, %s132
      %p144 = scmp.eq.s32.totalorder %s33, 1
      %p145 = por %p143, %p144
      %p147 = scmp.ne.s32.totalorder %s132, %s146
      %p148 = scmp.eq.s32.totalorder %s33, 0
      %p149 = por %p147, %p148
      %s151 = sadd.s32 %s150, 1
      %p154 = scmp.eq.s32.totalorder %s27, 1
      %p155 = scmp.ne.s32.totalorder %s150, %s152
      %p156 = scmp.eq.s32.totalorder %s27, 0
      %p157 = por %p155, %p156
      %p158 = scmp.ne.s32.totalorder %s150, %s152
      %p159 = scmp.eq.s32.totalorder %s32, 1
      %p160 = por %p158, %p159
      %p161 = scmp.ne.s32.totalorder %s152, %s153
      %p162 = scmp.eq.s32.totalorder %s32, 0
      %p163 = por %p161, %p162
      %p164 = scmp.ne.s32.totalorder %s152, %s153
      %p165 = scmp.eq.s32.totalorder %s33, 1
      %p166 = por %p164, %p165
      %p168 = scmp.ne.s32.totalorder %s153, %s167
      %p169 = scmp.eq.s32.totalorder %s33, 0
      %p170 = por %p168, %p169
      %s172 = sadd.s32 %s171, 1
      %p175 = scmp.eq.s32.totalorder %s27, 1
      %p176 = scmp.ne.s32.totalorder %s171, %s173
      %p177 = scmp.eq.s32.totalorder %s27, 0
      %p178 = por %p176, %p177
      %p179 = scmp.ne.s32.totalorder %s171, %s173
      %p180 = scmp.eq.s32.totalorder %s32, 1
      %p181 = por %p179, %p180
      %p182 = scmp.ne.s32.totalorder %s173, %s174
      %p183 = scmp.eq.s32.totalorder %s32, 0
      %p184 = por %p182, %p183
      %p185 = scmp.ne.s32.totalorder %s173, %s174
      %p186 = scmp.eq.s32.totalorder %s33, 1
      %p187 = por %p185, %p186
      %p189 = scmp.ne.s32.totalorder %s174, %s188
      %p190 = scmp.eq.s32.totalorder %s33, 0
      %p191 = por %p189, %p190
      %s193 = sadd.s32 %s192, 1
      %p196 = scmp.eq.s32.totalorder %s27, 1
      %p197 = scmp.ne.s32.totalorder %s192, %s194
      %p198 = scmp.eq.s32.totalorder %s27, 0
      %p199 = por %p197, %p198
      %p200 = scmp.ne.s32.totalorder %s192, %s194
      %p201 = scmp.eq.s32.totalorder %s32, 1
      %p202 = por %p200, %p201
      %p203 = scmp.ne.s32.totalorder %s194, %s195
      %p204 = scmp.eq.s32.totalorder %s32, 0
      %p205 = por %p203, %p204
      %p206 = scmp.ne.s32.totalorder %s194, %s195
      %p207 = scmp.eq.s32.totalorder %s33, 1
      %p208 = por %p206, %p207
      %p210 = scmp.ne.s32.totalorder %s195, %s209
      %p211 = scmp.eq.s32.totalorder %s33, 0
      %p212 = por %p210, %p211
      %s214 = sadd.s32 %s213, 1
      %p217 = scmp.eq.s32.totalorder %s27, 1
      %p218 = scmp.ne.s32.totalorder %s213, %s215
      %p219 = scmp.eq.s32.totalorder %s27, 0
      %p220 = por %p218, %p219
      %p221 = scmp.ne.s32.totalorder %s213, %s215
      %p222 = scmp.eq.s32.totalorder %s32, 1
      %p223 = por %p221, %p222
      %p224 = scmp.ne.s32.totalorder %s215, %s216
      %p225 = scmp.eq.s32.totalorder %s32, 0
      %p226 = por %p224, %p225
      %p227 = scmp.ne.s32.totalorder %s215, %s216
      %p228 = scmp.eq.s32.totalorder %s33, 1
      %p229 = por %p227, %p228
      %p231 = scmp.ne.s32.totalorder %s216, %s230
      %p232 = scmp.eq.s32.totalorder %s33, 0
      %p233 = por %p231, %p232
      %s235 = sadd.s32 %s234, 1
      %p238 = scmp.eq.s32.totalorder %s27, 1
      %p239 = scmp.ne.s32.totalorder %s234, %s236
      %p240 = scmp.eq.s32.totalorder %s27, 0
      %p241 = por %p239, %p240
      %p242 = scmp.ne.s32.totalorder %s234, %s236
      %p243 = scmp.eq.s32.totalorder %s32, 1
      %p244 = por %p242, %p243
      %p245 = scmp.ne.s32.totalorder %s236, %s237
      %p246 = scmp.eq.s32.totalorder %s32, 0
      %p247 = por %p245, %p246
      %p248 = scmp.ne.s32.totalorder %s236, %s237
      %p249 = scmp.eq.s32.totalorder %s33, 1
      %p250 = por %p248, %p249
      %p252 = scmp.ne.s32.totalorder %s237, %s251
      %p253 = scmp.eq.s32.totalorder %s33, 0
      %p254 = por %p252, %p253
      %s255 = ssub.s32 %s27, %s34
      %p256 = scmp.eq.s32.totalorder %s255, 0
      %s258 = sadd.s32 %s257, 1
      %s259 = scalar_select %p256, %s257, %s258
      %p262 = pneg %p256
      %p263 = scmp.eq.s32.totalorder %s27, 1
      %p264 = por %p262, %p263
      %p265 = scmp.ne.s32.totalorder %s257, %s260
      %p266 = scmp.eq.s32.totalorder %s27, 0
      %p267 = por %p265, %p266
      %p268 = scmp.ne.s32.totalorder %s257, %s260
      %p269 = scmp.eq.s32.totalorder %s32, 1
      %p270 = por %p268, %p269
      %p271 = scmp.ne.s32.totalorder %s260, %s261
      %p272 = scmp.eq.s32.totalorder %s32, 0
      %p273 = por %p271, %p272
      %p274 = scmp.ne.s32.totalorder %s260, %s261
      %p275 = scmp.eq.s32.totalorder %s33, 1
      %p276 = por %p274, %p275
      %p278 = scmp.ne.s32.totalorder %s261, %s277
      %p279 = scmp.eq.s32.totalorder %s33, 0
      %p280 = por %p278, %p279
      %p281 = scmp.le.s32.totalorder 1, %s27
      %p282 = scmp.lt.s32.totalorder %s27, 3
      %p283 = pnand %p281, %p282
      %p284 = pneg %p283
      // Predicated region
      $region9: #{tpu_custom_call.1} parent=5 // pred_check
        _
      $region10: #{tpu_custom_call.1} parent=5 // pred_check_branch
        %286 = sbr.rel (%p283) target = $region12
      $region11: #{tpu_custom_call.1} parent=5 // pred_region
        %s287 = ssub.s32 %s27, 1
        // Predicated region
        $region13: #{tpu_custom_call.1} parent=11 // pred_check
          %p288 = pneg %p100
        $region14: #{tpu_custom_call.1} parent=11 // pred_check_branch
          %290 = sbr.rel (%p288) target = $region16
        $region15: #{tpu_custom_call.1} parent=11 // pred_region
          %s292 = ssub.s32 256, 256
          %293 = vsyncadd [#allocation6], %s292
          %s294 = sshll.u32 [#allocation7], 4
          %s295 = int_to_ptr.vmem [resolvable:$true] %s294
          %300 = dma.hbm_to_vmem [thread:$0]  %s2, 256, %s295, [#allocation6], 128, 128, 8
        $region16: #{tpu_custom_call.1} parent=11 // pred_fallthru
          _
        // Predicated region
        $region17: #{tpu_custom_call.1} parent=11 // pred_check
          %p301 = pneg %p121
        $region18: #{tpu_custom_call.1} parent=11 // pred_check_branch
          %303 = sbr.rel (%p301) target = $region20
        $region19: #{tpu_custom_call.1} parent=11 // pred_region
          _
        $region20: #{tpu_custom_call.1} parent=11 // pred_fallthru
          _
        // Predicated region
        $region21: #{tpu_custom_call.1} parent=11 // pred_check
          %p304 = pneg %p142
        $region22: #{tpu_custom_call.1} parent=11 // pred_check_branch
          %306 = sbr.rel (%p304) target = $region24
        $region23: #{tpu_custom_call.1} parent=11 // pred_region
          %s308 = ssub.s32 256, 256
          %309 = vsyncadd [#allocation9], %s308
          %s310 = sshll.u32 [#allocation8], 4
          %s311 = int_to_ptr.vmem [resolvable:$true] %s310
          %316 = dma.hbm_to_vmem [thread:$0]  %s4, 256, %s311, [#allocation9], 128, 128, 8
        $region24: #{tpu_custom_call.1} parent=11 // pred_fallthru
          _
        // Predicated region
        $region25: #{tpu_custom_call.1} parent=11 // pred_check
          %p317 = pneg %p163
        $region26: #{tpu_custom_call.1} parent=11 // pred_check_branch
          %319 = sbr.rel (%p317) target = $region28
        $region27: #{tpu_custom_call.1} parent=11 // pred_region
          _
        $region28: #{tpu_custom_call.1} parent=11 // pred_fallthru
          _
        // Predicated region
        $region29: #{tpu_custom_call.1} parent=11 // pred_check
          %p320 = pneg %p184
        $region30: #{tpu_custom_call.1} parent=11 // pred_check_branch
          %322 = sbr.rel (%p320) target = $region32
        $region31: #{tpu_custom_call.1} parent=11 // pred_region
          %s324 = ssub.s32 256, 256
          %325 = vsyncadd [#allocation9], %s324
          %s326 = sshll.u32 [#allocation10], 4
          %s327 = int_to_ptr.vmem [resolvable:$true] %s326
          %332 = dma.hbm_to_vmem [thread:$0]  %s6, 256, %s327, [#allocation9], 128, 128, 8
        $region32: #{tpu_custom_call.1} parent=11 // pred_fallthru
          _
        // Predicated region
        $region33: #{tpu_custom_call.1} parent=11 // pred_check
          %p333 = pneg %p205
        $region34: #{tpu_custom_call.1} parent=11 // pred_check_branch
          %335 = sbr.rel (%p333) target = $region36
        $region35: #{tpu_custom_call.1} parent=11 // pred_region
          _
        $region36: #{tpu_custom_call.1} parent=11 // pred_fallthru
          _
        // Predicated region
        $region37: #{tpu_custom_call.1} parent=11 // pred_check
          %p336 = pneg %p226
        $region38: #{tpu_custom_call.1} parent=11 // pred_check_branch
          %338 = sbr.rel (%p336) target = $region40
        $region39: #{tpu_custom_call.1} parent=11 // pred_region
          %s340 = ssub.s32 512, 512
          %341 = vsyncadd [#allocation12], %s340
          %s342 = sshll.u32 [#allocation11], 4
          %s343 = int_to_ptr.vmem [resolvable:$true] %s342
          %348 = dma.hbm_to_vmem [thread:$0]  %s8, 512, %s343, [#allocation12], 128, 128, 8
        $region40: #{tpu_custom_call.1} parent=11 // pred_fallthru
          _
        // Predicated region
        $region41: #{tpu_custom_call.1} parent=11 // pred_check
          %p349 = pneg %p247
        $region42: #{tpu_custom_call.1} parent=11 // pred_check_branch
          %351 = sbr.rel (%p349) target = $region44
        $region43: #{tpu_custom_call.1} parent=11 // pred_region
          _
        $region44: #{tpu_custom_call.1} parent=11 // pred_fallthru
          _
      $region12: #{tpu_custom_call.1} parent=5 // pred_fallthru
        _
      %p352 = scmp.lt.s32.totalorder %s27, 2
      // Predicated region
      $region45: #{tpu_custom_call.1} parent=5 // pred_check
        %p353 = pneg %p352
      $region46: #{tpu_custom_call.1} parent=5 // pred_check_branch
        %355 = sbr.rel (%p353) target = $region48
      $region47: #{tpu_custom_call.1} parent=5 // pred_region
        // Predicated region
        $region49: #{tpu_custom_call.1} parent=47 // pred_check
          %p356 = pneg %p47
        $region50: #{tpu_custom_call.1} parent=47 // pred_check_branch
          %358 = sbr.rel (%p356) target = $region52
        $region51: #{tpu_custom_call.1} parent=47 // pred_region
          %s359 = sand.u32 %s37, 1
          %s360 = scalar_lea.sflag [#allocation3], %s359
          %s361 = sand.u32 %s37, 1
          %s362 = smul.addr %s361, 8
          %s363 = scalar_lea.vmem [#allocation2], %s362
          %s365 = ssub.s32 128, 128
          %366 = vsyncadd %s360, %s365
          %s367 = smul.addr %s27, 128
          %s368 = scalar_lea.hbm %s0, %s367
          %s370 = sshll.u32 %s363, 4
          %s371 = int_to_ptr.vmem [resolvable:$true] %s370
          %373 = dma.hbm_to_vmem [thread:$0]  %s368, 128, %s371, %s360
        $region52: #{tpu_custom_call.1} parent=47 // pred_fallthru
          _
        // Predicated region
        $region53: #{tpu_custom_call.1} parent=47 // pred_check
          %p374 = pneg %p73
        $region54: #{tpu_custom_call.1} parent=47 // pred_check_branch
          %376 = sbr.rel (%p374) target = $region56
        $region55: #{tpu_custom_call.1} parent=47 // pred_region
          %s377 = sand.u32 %s27, 1
          %s378 = scalar_lea.sflag [#allocation6], %s377
          %s379 = sand.u32 %s63, 1
          %s380 = smul.addr %s379, 8
          %s381 = scalar_lea.vmem [#allocation5], %s380
          %s383 = ssub.s32 128, 128
          %384 = vsyncadd %s378, %s383
          %s385 = smul.addr %s27, 128
          %s386 = scalar_lea.hbm %s1, %s385
          %s388 = sshll.u32 %s381, 4
          %s389 = int_to_ptr.vmem [resolvable:$true] %s388
          %391 = dma.hbm_to_vmem [thread:$0]  %s386, 128, %s389, %s378
        $region56: #{tpu_custom_call.1} parent=47 // pred_fallthru
          _
      $region48: #{tpu_custom_call.1} parent=5 // pred_fallthru
        _
      %p392 = scmp.le.s32.totalorder 1, %s27
      %p393 = scmp.lt.s32.totalorder %s27, 3
      %p394 = pnand %p392, %p393
      %p395 = pneg %p394
      // Predicated region
      $region57: #{tpu_custom_call.1} parent=5 // pred_check
        _
      $region58: #{tpu_custom_call.1} parent=5 // pred_check_branch
        %397 = sbr.rel (%p394) target = $region60
      $region59: #{tpu_custom_call.1} parent=5 // pred_region
        %s398 = ssub.s32 %s27, 1
        %s399 = sand.u32 %s40, 1
        %s400 = scalar_lea.sflag [#allocation3], %s399
        %s401 = sand.u32 %s40, 1
        %s402 = smul.addr %s401, 8
        %s403 = scalar_lea.vmem [#allocation2], %s402
        // Predicated region
        $region61: #{tpu_custom_call.1} parent=59 // pred_check
          %p404 = pneg %p53
        $region62: #{tpu_custom_call.1} parent=59 // pred_check_branch
          %406 = sbr.rel (%p404) target = $region64
        $region63: #{tpu_custom_call.1} parent=59 // pred_region
          %407 = dma.done %s400, 128
        $region64: #{tpu_custom_call.1} parent=59 // pred_fallthru
          _
        %s408 = sand.u32 %s32, 1
        %s409 = scalar_lea.sflag [#allocation6], %s408
        %s410 = sand.u32 %s66, 1
        %s411 = smul.addr %s410, 8
        %s412 = scalar_lea.vmem [#allocation5], %s411
        // Predicated region
        $region65: #{tpu_custom_call.1} parent=59 // pred_check
          %p413 = pneg %p79
        $region66: #{tpu_custom_call.1} parent=59 // pred_check_branch
          %415 = sbr.rel (%p413) target = $region68
        $region67: #{tpu_custom_call.1} parent=59 // pred_region
          %416 = dma.done %s409, 128
        $region68: #{tpu_custom_call.1} parent=59 // pred_fallthru
          _
        // Predicated region
        $region69: #{tpu_custom_call.1} parent=59 // pred_check
          %p417 = pneg %p100
        $region70: #{tpu_custom_call.1} parent=59 // pred_check_branch
          %419 = sbr.rel (%p417) target = $region72
        $region71: #{tpu_custom_call.1} parent=59 // pred_region
          %420 = dma.done [#allocation6], 256
        $region72: #{tpu_custom_call.1} parent=59 // pred_fallthru
          _
        // Predicated region
        $region73: #{tpu_custom_call.1} parent=59 // pred_check
          %p421 = pneg %p142
        $region74: #{tpu_custom_call.1} parent=59 // pred_check_branch
          %423 = sbr.rel (%p421) target = $region76
        $region75: #{tpu_custom_call.1} parent=59 // pred_region
          %424 = dma.done [#allocation9], 256
        $region76: #{tpu_custom_call.1} parent=59 // pred_fallthru
          _
        // Predicated region
        $region77: #{tpu_custom_call.1} parent=59 // pred_check
          %p425 = pneg %p184
        $region78: #{tpu_custom_call.1} parent=59 // pred_check_branch
          %427 = sbr.rel (%p425) target = $region80
        $region79: #{tpu_custom_call.1} parent=59 // pred_region
          %428 = dma.done [#allocation9], 256
        $region80: #{tpu_custom_call.1} parent=59 // pred_fallthru
          _
        // Predicated region
        $region81: #{tpu_custom_call.1} parent=59 // pred_check
          %p429 = pneg %p226
        $region82: #{tpu_custom_call.1} parent=59 // pred_check_branch
          %431 = sbr.rel (%p429) target = $region84
        $region83: #{tpu_custom_call.1} parent=59 // pred_region
          %432 = dma.done [#allocation12], 512
        $region84: #{tpu_custom_call.1} parent=59 // pred_fallthru
          _
        %s433 = sand.u32 %s40, 1
        %s434 = scalar_lea.sflag [#allocation3], %s433
        %s435 = sand.u32 %s40, 1
        %s436 = smul.addr %s435, 8
        %s437 = scalar_lea.vmem [#allocation2], %s436
        %p438 = pneg %p53
        %p439 = pneg %p50
        %s440 = sand.u32 %s32, 1
        %s441 = scalar_lea.sflag [#allocation6], %s440
        %s442 = sand.u32 %s66, 1
        %s443 = smul.addr %s442, 8
        %s444 = scalar_lea.vmem [#allocation5], %s443
        %p445 = pneg %p79
        %p446 = pneg %p76
        %p447 = pneg %p100
        %p448 = pneg %p97
        %p449 = pneg %p121
        %p450 = pneg %p118
        %p451 = pneg %p142
        %p452 = pneg %p139
        %p453 = pneg %p163
        %p454 = pneg %p160
        %p455 = pneg %p184
        %p456 = pneg %p181
        %p457 = pneg %p205
        %p458 = pneg %p202
        %p459 = pneg %p226
        %p460 = pneg %p223
        %p461 = pneg %p247
        %p462 = pneg %p244
        %p463 = pneg %p273
        %p464 = pneg %p270
        %s465 = sand.u32 %s260, 1
        %s466 = scalar_lea.sflag [#allocation4], %s465
        %s467 = sand.u32 %s260, 1
        %s468 = smul.addr %s467, 8
        %s469 = scalar_lea.vmem [#allocation13], %s468
        %v470 = vld [vmem:[%s403] sm:$0xff]
        %v471 = vld [vmem:[%s412] sm:$0xff]
        %v472 = vld [vmem:[#allocation7] sm:$0xff]
        %v473 = vld [vmem:[#allocation7 + $0x8] sm:$0xff]
        %v474 = vld [vmem:[%s3] sm:$0x1]
        %v476 = vlaneseq
        %v477 = vshrl.u32 %v476, 7
        %v478 = vsub.s32 0, %v477
        %v479 = vrot.slane %v474, %v478
        %vm481 = vcmask 130048
        %v483 = vsel %vm481, %v470, 0
        %485 = vmatprep.subr.mxu0 0.0
        %486 = vmatpush1.msra.mxu0 0.0
        %487 = vmatprep.subr.mxu0 0.0
        %488 = vmatpush1.msra.mxu0 0.0
        %489 = vmatprep.subr.mxu0 0.0
        %490 = vmatpush1.msra.mxu0 0.0
        %491 = vmatprep.subr.mxu0 0.0
        %492 = vmatpush1.msra.mxu0 0.0
        %493 = vmatprep.subr.mxu0 0.0
        %494 = vmatpush1.msra.mxu0 0.0
        %495 = vmatprep.subr.mxu0 0.0
        %496 = vmatpush1.msra.mxu0 0.0
        %497 = vmatprep.subr.mxu0 0.0
        %498 = vmatpush1.msra.mxu0 0.0
        %499 = vmatprep.subr.mxu0 0.0
        %500 = vmatpush1.msra.mxu0 0.0
        %501 = vmatprep.subr.mxu0 0.0
        %502 = vmatpush1.msra.mxu0 0.0
        %503 = vmatprep.subr.mxu0 0.0
        %504 = vmatpush1.msra.mxu0 0.0
        %505 = vmatprep.subr.mxu0 0.0
        %506 = vmatpush1.msra.mxu0 0.0
        %507 = vmatprep.subr.mxu0 0.0
        %508 = vmatpush1.msra.mxu0 0.0
        %509 = vmatprep.subr.mxu0 0.0
        %510 = vmatpush1.msra.mxu0 0.0
        %511 = vmatprep.subr.mxu0 0.0
        %512 = vmatpush1.msra.mxu0 0.0
        %513 = vmatprep.subr.mxu0 0.0
        %514 = vmatpush1.msra.mxu0 %v473
        %515 = vmatprep.subr.mxu0 0.0
        %516 = vmatpush1.msra.mxu0 %v472
        %517 = vmatprep.subr.mxu0 0.0
        %518 = vmatpush2.msra.mxu0 0.0
        %519 = vmatprep.subr.mxu0 0.0
        %520 = vmatpush2.msra.mxu0 0.0
        %521 = vmatprep.subr.mxu0 0.0
        %522 = vmatpush2.msra.mxu0 0.0
        %523 = vmatprep.subr.mxu0 0.0
        %524 = vmatpush2.msra.mxu0 0.0
        %525 = vmatprep.subr.mxu0 0.0
        %526 = vmatpush2.msra.mxu0 0.0
        %527 = vmatprep.subr.mxu0 0.0
        %528 = vmatpush2.msra.mxu0 0.0
        %529 = vmatprep.subr.mxu0 0.0
        %530 = vmatpush2.msra.mxu0 0.0
        %531 = vmatprep.subr.mxu0 0.0
        %532 = vmatpush2.msra.mxu0 0.0
        %533 = vmatprep.subr.mxu0 0.0
        %534 = vmatpush2.msra.mxu0 0.0
        %535 = vmatprep.subr.mxu0 0.0
        %536 = vmatpush2.msra.mxu0 0.0
        %537 = vmatprep.subr.mxu0 0.0
        %538 = vmatpush2.msra.mxu0 0.0
        %539 = vmatprep.subr.mxu0 0.0
        %540 = vmatpush2.msra.mxu0 0.0
        %541 = vmatprep.subr.mxu0 0.0
        %542 = vmatpush2.msra.mxu0 0.0
        %543 = vmatprep.subr.mxu0 0.0
        %544 = vmatpush2.msra.mxu0 0.0
        %545 = vmatprep.subr.mxu0 0.0
        %546 = vmatpush2.msra.mxu0 0.0
        %547 = vmatprep.subr.mxu0 0.0
        %548 = vmatpush2.msra.mxu0 0.0
        %549 = vmatprep.mubr.f32.mxu0 0.0
        %550 = vmatmul.mubr.f32.gmra.mxu0 %v483
        %v551 = vpop.f32.mrf.mxu0
        %v552 = vadd.f32 %v479, %v551
        %v553 = vpop.f32.mrf.mxu0
        %554 = vdwg.mxu0
        %v555 = vld [vmem:[#allocation8] sm:$0xff]
        %v556 = vld [vmem:[#allocation8 + $0x8] sm:$0xf]
        %v557 = vld [vmem:[%s5] sm:$0x1]
        %v559 = vlaneseq
        %v560 = vshrl.u32 %v559, 7
        %v561 = vsub.s32 0, %v560
        %v562 = vrot.slane %v557, %v561
        %vm564 = vcmask 97280
        %v566 = vsel %vm564, %v471, 0
        %vm568 = vcmask 1043456
        %v570 = vsel %vm568, %v556, 0
        %572 = vmatprep.subr.mxu0 0.0
        %573 = vmatpush1.msra.mxu0 0.0
        %574 = vmatprep.subr.mxu0 0.0
        %575 = vmatpush1.msra.mxu0 0.0
        %576 = vmatprep.subr.mxu0 0.0
        %577 = vmatpush1.msra.mxu0 0.0
        %578 = vmatprep.subr.mxu0 0.0
        %579 = vmatpush1.msra.mxu0 0.0
        %580 = vmatprep.subr.mxu0 0.0
        %581 = vmatpush1.msra.mxu0 0.0
        %582 = vmatprep.subr.mxu0 0.0
        %583 = vmatpush1.msra.mxu0 0.0
        %584 = vmatprep.subr.mxu0 0.0
        %585 = vmatpush1.msra.mxu0 0.0
        %586 = vmatprep.subr.mxu0 0.0
        %587 = vmatpush1.msra.mxu0 0.0
        %588 = vmatprep.subr.mxu0 0.0
        %589 = vmatpush1.msra.mxu0 0.0
        %590 = vmatprep.subr.mxu0 0.0
        %591 = vmatpush1.msra.mxu0 0.0
        %592 = vmatprep.subr.mxu0 0.0
        %593 = vmatpush1.msra.mxu0 0.0
        %594 = vmatprep.subr.mxu0 0.0
        %595 = vmatpush1.msra.mxu0 0.0
        %596 = vmatprep.subr.mxu0 0.0
        %597 = vmatpush1.msra.mxu0 0.0
        %598 = vmatprep.subr.mxu0 0.0
        %599 = vmatpush1.msra.mxu0 0.0
        %600 = vmatprep.subr.mxu0 0.0
        %601 = vmatpush1.msra.mxu0 %v570
        %602 = vmatprep.subr.mxu0 0.0
        %603 = vmatpush1.msra.mxu0 %v555
        %604 = vmatprep.subr.mxu0 0.0
        %605 = vmatpush2.msra.mxu0 0.0
        %606 = vmatprep.subr.mxu0 0.0
        %607 = vmatpush2.msra.mxu0 0.0
        %608 = vmatprep.subr.mxu0 0.0
        %609 = vmatpush2.msra.mxu0 0.0
        %610 = vmatprep.subr.mxu0 0.0
        %611 = vmatpush2.msra.mxu0 0.0
        %612 = vmatprep.subr.mxu0 0.0
        %613 = vmatpush2.msra.mxu0 0.0
        %614 = vmatprep.subr.mxu0 0.0
        %615 = vmatpush2.msra.mxu0 0.0
        %616 = vmatprep.subr.mxu0 0.0
        %617 = vmatpush2.msra.mxu0 0.0
        %618 = vmatprep.subr.mxu0 0.0
        %619 = vmatpush2.msra.mxu0 0.0
        %620 = vmatprep.subr.mxu0 0.0
        %621 = vmatpush2.msra.mxu0 0.0
        %622 = vmatprep.subr.mxu0 0.0
        %623 = vmatpush2.msra.mxu0 0.0
        %624 = vmatprep.subr.mxu0 0.0
        %625 = vmatpush2.msra.mxu0 0.0
        %626 = vmatprep.subr.mxu0 0.0
        %627 = vmatpush2.msra.mxu0 0.0
        %628 = vmatprep.subr.mxu0 0.0
        %629 = vmatpush2.msra.mxu0 0.0
        %630 = vmatprep.subr.mxu0 0.0
        %631 = vmatpush2.msra.mxu0 0.0
        %632 = vmatprep.subr.mxu0 0.0
        %633 = vmatpush2.msra.mxu0 0.0
        %634 = vmatprep.subr.mxu0 0.0
        %635 = vmatpush2.msra.mxu0 0.0
        %636 = vmatprep.mubr.f32.mxu0 0.0
        %637 = vmatmul.mubr.f32.gmra.mxu0 %v566
        %v638 = vpop.f32.mrf.mxu0
        %v639 = vadd.f32 %v562, %v638
        %v640 = vpop.f32.mrf.mxu0
        %641 = vdwg.mxu0
        %v642 = vld [vmem:[#allocation10] sm:$0xff]
        %v643 = vld [vmem:[#allocation10 + $0x8] sm:$0xf]
        %v644 = vld [vmem:[%s7] sm:$0x1]
        %v646 = vlaneseq
        %v647 = vshrl.u32 %v646, 7
        %v648 = vsub.s32 0, %v647
        %v649 = vrot.slane %v644, %v648
        %v652 = vsel %vm568, %v643, 0
        %654 = vmatprep.subr.mxu0 0.0
        %655 = vmatpush1.msra.mxu0 0.0
        %656 = vmatprep.subr.mxu0 0.0
        %657 = vmatpush1.msra.mxu0 0.0
        %658 = vmatprep.subr.mxu0 0.0
        %659 = vmatpush1.msra.mxu0 0.0
        %660 = vmatprep.subr.mxu0 0.0
        %661 = vmatpush1.msra.mxu0 0.0
        %662 = vmatprep.subr.mxu0 0.0
        %663 = vmatpush1.msra.mxu0 0.0
        %664 = vmatprep.subr.mxu0 0.0
        %665 = vmatpush1.msra.mxu0 0.0
        %666 = vmatprep.subr.mxu0 0.0
        %667 = vmatpush1.msra.mxu0 0.0
        %668 = vmatprep.subr.mxu0 0.0
        %669 = vmatpush1.msra.mxu0 0.0
        %670 = vmatprep.subr.mxu0 0.0
        %671 = vmatpush1.msra.mxu0 0.0
        %672 = vmatprep.subr.mxu0 0.0
        %673 = vmatpush1.msra.mxu0 0.0
        %674 = vmatprep.subr.mxu0 0.0
        %675 = vmatpush1.msra.mxu0 0.0
        %676 = vmatprep.subr.mxu0 0.0
        %677 = vmatpush1.msra.mxu0 0.0
        %678 = vmatprep.subr.mxu0 0.0
        %679 = vmatpush1.msra.mxu0 0.0
        %680 = vmatprep.subr.mxu0 0.0
        %681 = vmatpush1.msra.mxu0 0.0
        %682 = vmatprep.subr.mxu0 0.0
        %683 = vmatpush1.msra.mxu0 %v652
        %684 = vmatprep.subr.mxu0 0.0
        %685 = vmatpush1.msra.mxu0 %v642
        %686 = vmatprep.subr.mxu0 0.0
        %687 = vmatpush2.msra.mxu0 0.0
        %688 = vmatprep.subr.mxu0 0.0
        %689 = vmatpush2.msra.mxu0 0.0
        %690 = vmatprep.subr.mxu0 0.0
        %691 = vmatpush2.msra.mxu0 0.0
        %692 = vmatprep.subr.mxu0 0.0
        %693 = vmatpush2.msra.mxu0 0.0
        %694 = vmatprep.subr.mxu0 0.0
        %695 = vmatpush2.msra.mxu0 0.0
        %696 = vmatprep.subr.mxu0 0.0
        %697 = vmatpush2.msra.mxu0 0.0
        %698 = vmatprep.subr.mxu0 0.0
        %699 = vmatpush2.msra.mxu0 0.0
        %700 = vmatprep.subr.mxu0 0.0
        %701 = vmatpush2.msra.mxu0 0.0
        %702 = vmatprep.subr.mxu0 0.0
        %703 = vmatpush2.msra.mxu0 0.0
        %704 = vmatprep.subr.mxu0 0.0
        %705 = vmatpush2.msra.mxu0 0.0
        %706 = vmatprep.subr.mxu0 0.0
        %707 = vmatpush2.msra.mxu0 0.0
        %708 = vmatprep.subr.mxu0 0.0
        %709 = vmatpush2.msra.mxu0 0.0
        %710 = vmatprep.subr.mxu0 0.0
        %711 = vmatpush2.msra.mxu0 0.0
        %712 = vmatprep.subr.mxu0 0.0
        %713 = vmatpush2.msra.mxu0 0.0
        %714 = vmatprep.subr.mxu0 0.0
        %715 = vmatpush2.msra.mxu0 0.0
        %716 = vmatprep.subr.mxu0 0.0
        %717 = vmatpush2.msra.mxu0 0.0
        %718 = vmatprep.mubr.f32.mxu0 0.0
        %719 = vmatmul.mubr.f32.gmra.mxu0 %v566
        %v720 = vpop.f32.mrf.mxu0
        %v721 = vadd.f32 %v649, %v720
        %v722 = vpop.f32.mrf.mxu0
        %723 = vdwg.mxu0
        %v724 = vmul.f32 %v552, 0.35355338
        %vm725 = vcmask 64512
        %v727 = vsel %vm725, %v724, 0
        %v730 = vsel %vm725, %v639, 0
        %732 = vmatprep.subr.mxu0 0.0
        %733 = vmatpush1.xpose.msra.mxu0 0.0
        %734 = vmatprep.subr.mxu0 0.0
        %735 = vmatpush1.xpose.msra.mxu0 0.0
        %736 = vmatprep.subr.mxu0 0.0
        %737 = vmatpush1.xpose.msra.mxu0 0.0
        %738 = vmatprep.subr.mxu0 0.0
        %739 = vmatpush1.xpose.msra.mxu0 0.0
        %740 = vmatprep.subr.mxu0 0.0
        %741 = vmatpush1.xpose.msra.mxu0 0.0
        %742 = vmatprep.subr.mxu0 0.0
        %743 = vmatpush1.xpose.msra.mxu0 0.0
        %744 = vmatprep.subr.mxu0 0.0
        %745 = vmatpush1.xpose.msra.mxu0 0.0
        %746 = vmatprep.subr.mxu0 0.0
        %747 = vmatpush1.xpose.msra.mxu0 0.0
        %748 = vmatprep.subr.mxu0 0.0
        %749 = vmatpush1.xpose.msra.mxu0 0.0
        %750 = vmatprep.subr.mxu0 0.0
        %751 = vmatpush1.xpose.msra.mxu0 0.0
        %752 = vmatprep.subr.mxu0 0.0
        %753 = vmatpush1.xpose.msra.mxu0 0.0
        %754 = vmatprep.subr.mxu0 0.0
        %755 = vmatpush1.xpose.msra.mxu0 0.0
        %756 = vmatprep.subr.mxu0 0.0
        %757 = vmatpush1.xpose.msra.mxu0 0.0
        %758 = vmatprep.subr.mxu0 0.0
        %759 = vmatpush1.xpose.msra.mxu0 0.0
        %760 = vmatprep.subr.mxu0 0.0
        %761 = vmatpush1.xpose.msra.mxu0 0.0
        %762 = vmatprep.subr.mxu0 0.0
        %763 = vmatpush1.xpose.msra.mxu0 %v730
        %764 = vmatprep.subr.mxu0 0.0
        %765 = vmatpush2.xpose.msra.mxu0 0.0
        %766 = vmatprep.subr.mxu0 0.0
        %767 = vmatpush2.xpose.msra.mxu0 0.0
        %768 = vmatprep.subr.mxu0 0.0
        %769 = vmatpush2.xpose.msra.mxu0 0.0
        %770 = vmatprep.subr.mxu0 0.0
        %771 = vmatpush2.xpose.msra.mxu0 0.0
        %772 = vmatprep.subr.mxu0 0.0
        %773 = vmatpush2.xpose.msra.mxu0 0.0
        %774 = vmatprep.subr.mxu0 0.0
        %775 = vmatpush2.xpose.msra.mxu0 0.0
        %776 = vmatprep.subr.mxu0 0.0
        %777 = vmatpush2.xpose.msra.mxu0 0.0
        %778 = vmatprep.subr.mxu0 0.0
        %779 = vmatpush2.xpose.msra.mxu0 0.0
        %780 = vmatprep.subr.mxu0 0.0
        %781 = vmatpush2.xpose.msra.mxu0 0.0
        %782 = vmatprep.subr.mxu0 0.0
        %783 = vmatpush2.xpose.msra.mxu0 0.0
        %784 = vmatprep.subr.mxu0 0.0
        %785 = vmatpush2.xpose.msra.mxu0 0.0
        %786 = vmatprep.subr.mxu0 0.0
        %787 = vmatpush2.xpose.msra.mxu0 0.0
        %788 = vmatprep.subr.mxu0 0.0
        %789 = vmatpush2.xpose.msra.mxu0 0.0
        %790 = vmatprep.subr.mxu0 0.0
        %791 = vmatpush2.xpose.msra.mxu0 0.0
        %792 = vmatprep.subr.mxu0 0.0
        %793 = vmatpush2.xpose.msra.mxu0 0.0
        %794 = vmatprep.subr.mxu0 0.0
        %795 = vmatpush2.xpose.msra.mxu0 0.0
        %796 = vmatprep.mubr.f32.mxu0 0.0
        %797 = vmatmul.mubr.f32.gmra.mxu0 %v727
        %v798 = vpop.f32.mrf.mxu0
        %v799 = vadd.f32 0.0, %v798
        %v800 = vpop.f32.mrf.mxu0
        %801 = vdwg.mxu0
        %v802 = vsel %vm725, %v799, -inf
        %803 = vmax.xlane.f32.xlu0 %v802
        %v804 = vpop.xlane.xlu0 %803
        %v805 = vsub.f32 %v799, %v804
        %v806 = vmul.f32 %v805, 1.442695
        %v807 = vpow.pop %v806
        %v808 = vsel %vm725, %v807, 0.0
        %809 = vadd.xlane.f32.xlu0 %v808
        %v810 = vpop.xlane.xlu0 %809
        %v811 = vrcp.pop %v810
        %v813 = vsel %vm725, %v807, 0
        %815 = vmatprep.subr.mxu0 0.0
        %816 = vmatpush1.msra.mxu0 0.0
        %817 = vmatprep.subr.mxu0 0.0
        %818 = vmatpush1.msra.mxu0 0.0
        %819 = vmatprep.subr.mxu0 0.0
        %820 = vmatpush1.msra.mxu0 0.0
        %821 = vmatprep.subr.mxu0 0.0
        %822 = vmatpush1.msra.mxu0 0.0
        %823 = vmatprep.subr.mxu0 0.0
        %824 = vmatpush1.msra.mxu0 0.0
        %825 = vmatprep.subr.mxu0 0.0
        %826 = vmatpush1.msra.mxu0 0.0
        %827 = vmatprep.subr.mxu0 0.0
        %828 = vmatpush1.msra.mxu0 0.0
        %829 = vmatprep.subr.mxu0 0.0
        %830 = vmatpush1.msra.mxu0 0.0
        %831 = vmatprep.subr.mxu0 0.0
        %832 = vmatpush1.msra.mxu0 0.0
        %833 = vmatprep.subr.mxu0 0.0
        %834 = vmatpush1.msra.mxu0 0.0
        %835 = vmatprep.subr.mxu0 0.0
        %836 = vmatpush1.msra.mxu0 0.0
        %837 = vmatprep.subr.mxu0 0.0
        %838 = vmatpush1.msra.mxu0 0.0
        %839 = vmatprep.subr.mxu0 0.0
        %840 = vmatpush1.msra.mxu0 0.0
        %841 = vmatprep.subr.mxu0 0.0
        %842 = vmatpush1.msra.mxu0 0.0
        %843 = vmatprep.subr.mxu0 0.0
        %844 = vmatpush1.msra.mxu0 0.0
        %845 = vmatprep.subr.mxu0 0.0
        %846 = vmatpush1.msra.mxu0 %v721
        %847 = vmatprep.subr.mxu0 0.0
        %848 = vmatpush2.msra.mxu0 0.0
        %849 = vmatprep.subr.mxu0 0.0
        %850 = vmatpush2.msra.mxu0 0.0
        %851 = vmatprep.subr.mxu0 0.0
        %852 = vmatpush2.msra.mxu0 0.0
        %853 = vmatprep.subr.mxu0 0.0
        %854 = vmatpush2.msra.mxu0 0.0
        %855 = vmatprep.subr.mxu0 0.0
        %856 = vmatpush2.msra.mxu0 0.0
        %857 = vmatprep.subr.mxu0 0.0
        %858 = vmatpush2.msra.mxu0 0.0
        %859 = vmatprep.subr.mxu0 0.0
        %860 = vmatpush2.msra.mxu0 0.0
        %861 = vmatprep.subr.mxu0 0.0
        %862 = vmatpush2.msra.mxu0 0.0
        %863 = vmatprep.subr.mxu0 0.0
        %864 = vmatpush2.msra.mxu0 0.0
        %865 = vmatprep.subr.mxu0 0.0
        %866 = vmatpush2.msra.mxu0 0.0
        %867 = vmatprep.subr.mxu0 0.0
        %868 = vmatpush2.msra.mxu0 0.0
        %869 = vmatprep.subr.mxu0 0.0
        %870 = vmatpush2.msra.mxu0 0.0
        %871 = vmatprep.subr.mxu0 0.0
        %872 = vmatpush2.msra.mxu0 0.0
        %873 = vmatprep.subr.mxu0 0.0
        %874 = vmatpush2.msra.mxu0 0.0
        %875 = vmatprep.subr.mxu0 0.0
        %876 = vmatpush2.msra.mxu0 0.0
        %877 = vmatprep.subr.mxu0 0.0
        %878 = vmatpush2.msra.mxu0 0.0
        %879 = vmatprep.mubr.f32.mxu0 0.0
        %880 = vmatmul.mubr.f32.gmra.mxu0 %v813
        %v881 = vpop.f32.mrf.mxu0
        %v882 = vadd.f32 0.0, %v881
        %v883 = vpop.f32.mrf.mxu0
        %884 = vdwg.mxu0
        %v885 = vmul.f32 %v882, %v811
        %v886 = vld [vmem:[#allocation11] sm:$0xff]
        %887 = vrot.lane.b32.xlu0 %v724, 120
        %v888 = vpop.permute.xlu0 %887
        %889 = vrot.lane.b32.xlu0 %v639, 120
        %v890 = vpop.permute.xlu0 %889
        %v891 = vsel %vm725, %v888, 0
        %v893 = vsel %vm725, %v890, 0
        %895 = vmatprep.subr.mxu0 0.0
        %896 = vmatpush1.xpose.msra.mxu0 0.0
        %897 = vmatprep.subr.mxu0 0.0
        %898 = vmatpush1.xpose.msra.mxu0 0.0
        %899 = vmatprep.subr.mxu0 0.0
        %900 = vmatpush1.xpose.msra.mxu0 0.0
        %901 = vmatprep.subr.mxu0 0.0
        %902 = vmatpush1.xpose.msra.mxu0 0.0
        %903 = vmatprep.subr.mxu0 0.0
        %904 = vmatpush1.xpose.msra.mxu0 0.0
        %905 = vmatprep.subr.mxu0 0.0
        %906 = vmatpush1.xpose.msra.mxu0 0.0
        %907 = vmatprep.subr.mxu0 0.0
        %908 = vmatpush1.xpose.msra.mxu0 0.0
        %909 = vmatprep.subr.mxu0 0.0
        %910 = vmatpush1.xpose.msra.mxu0 0.0
        %911 = vmatprep.subr.mxu0 0.0
        %912 = vmatpush1.xpose.msra.mxu0 0.0
        %913 = vmatprep.subr.mxu0 0.0
        %914 = vmatpush1.xpose.msra.mxu0 0.0
        %915 = vmatprep.subr.mxu0 0.0
        %916 = vmatpush1.xpose.msra.mxu0 0.0
        %917 = vmatprep.subr.mxu0 0.0
        %918 = vmatpush1.xpose.msra.mxu0 0.0
        %919 = vmatprep.subr.mxu0 0.0
        %920 = vmatpush1.xpose.msra.mxu0 0.0
        %921 = vmatprep.subr.mxu0 0.0
        %922 = vmatpush1.xpose.msra.mxu0 0.0
        %923 = vmatprep.subr.mxu0 0.0
        %924 = vmatpush1.xpose.msra.mxu0 0.0
        %925 = vmatprep.subr.mxu0 0.0
        %926 = vmatpush1.xpose.msra.mxu0 %v893
        %927 = vmatprep.subr.mxu0 0.0
        %928 = vmatpush2.xpose.msra.mxu0 0.0
        %929 = vmatprep.subr.mxu0 0.0
        %930 = vmatpush2.xpose.msra.mxu0 0.0
        %931 = vmatprep.subr.mxu0 0.0
        %932 = vmatpush2.xpose.msra.mxu0 0.0
        %933 = vmatprep.subr.mxu0 0.0
        %934 = vmatpush2.xpose.msra.mxu0 0.0
        %935 = vmatprep.subr.mxu0 0.0
        %936 = vmatpush2.xpose.msra.mxu0 0.0
        %937 = vmatprep.subr.mxu0 0.0
        %938 = vmatpush2.xpose.msra.mxu0 0.0
        %939 = vmatprep.subr.mxu0 0.0
        %940 = vmatpush2.xpose.msra.mxu0 0.0
        %941 = vmatprep.subr.mxu0 0.0
        %942 = vmatpush2.xpose.msra.mxu0 0.0
        %943 = vmatprep.subr.mxu0 0.0
        %944 = vmatpush2.xpose.msra.mxu0 0.0
        %945 = vmatprep.subr.mxu0 0.0
        %946 = vmatpush2.xpose.msra.mxu0 0.0
        %947 = vmatprep.subr.mxu0 0.0
        %948 = vmatpush2.xpose.msra.mxu0 0.0
        %949 = vmatprep.subr.mxu0 0.0
        %950 = vmatpush2.xpose.msra.mxu0 0.0
        %951 = vmatprep.subr.mxu0 0.0
        %952 = vmatpush2.xpose.msra.mxu0 0.0
        %953 = vmatprep.subr.mxu0 0.0
        %954 = vmatpush2.xpose.msra.mxu0 0.0
        %955 = vmatprep.subr.mxu0 0.0
        %956 = vmatpush2.xpose.msra.mxu0 0.0
        %957 = vmatprep.subr.mxu0 0.0
        %958 = vmatpush2.xpose.msra.mxu0 0.0
        %959 = vmatprep.mubr.f32.mxu0 0.0
        %960 = vmatmul.mubr.f32.gmra.mxu0 %v891
        %v961 = vpop.f32.mrf.mxu0
        %v962 = vadd.f32 0.0, %v961
        %v963 = vpop.f32.mrf.mxu0
        %964 = vdwg.mxu0
        %v965 = vsel %vm725, %v962, -inf
        %966 = vmax.xlane.f32.xlu0 %v965
        %v967 = vpop.xlane.xlu0 %966
        %v968 = vsub.f32 %v962, %v967
        %v969 = vmul.f32 %v968, 1.442695
        %v970 = vpow.pop %v969
        %v971 = vsel %vm725, %v970, 0.0
        %972 = vadd.xlane.f32.xlu0 %v971
        %v973 = vpop.xlane.xlu0 %972
        %v974 = vrcp.pop %v973
        %976 = vrot.lane.b32.xlu0 %v721, 120
        %v977 = vpop.permute.xlu0 %976
        %v980 = vsel %vm725, %v970, 0
        %982 = vmatprep.subr.mxu0 0.0
        %983 = vmatpush1.msra.mxu0 0.0
        %984 = vmatprep.subr.mxu0 0.0
        %985 = vmatpush1.msra.mxu0 0.0
        %986 = vmatprep.subr.mxu0 0.0
        %987 = vmatpush1.msra.mxu0 0.0
        %988 = vmatprep.subr.mxu0 0.0
        %989 = vmatpush1.msra.mxu0 0.0
        %990 = vmatprep.subr.mxu0 0.0
        %991 = vmatpush1.msra.mxu0 0.0
        %992 = vmatprep.subr.mxu0 0.0
        %993 = vmatpush1.msra.mxu0 0.0
        %994 = vmatprep.subr.mxu0 0.0
        %995 = vmatpush1.msra.mxu0 0.0
        %996 = vmatprep.subr.mxu0 0.0
        %997 = vmatpush1.msra.mxu0 0.0
        %998 = vmatprep.subr.mxu0 0.0
        %999 = vmatpush1.msra.mxu0 0.0
        %1000 = vmatprep.subr.mxu0 0.0
        %1001 = vmatpush1.msra.mxu0 0.0
        %1002 = vmatprep.subr.mxu0 0.0
        %1003 = vmatpush1.msra.mxu0 0.0
        %1004 = vmatprep.subr.mxu0 0.0
        %1005 = vmatpush1.msra.mxu0 0.0
        %1006 = vmatprep.subr.mxu0 0.0
        %1007 = vmatpush1.msra.mxu0 0.0
        %1008 = vmatprep.subr.mxu0 0.0
        %1009 = vmatpush1.msra.mxu0 0.0
        %1010 = vmatprep.subr.mxu0 0.0
        %1011 = vmatpush1.msra.mxu0 0.0
        %1012 = vmatprep.subr.mxu0 0.0
        %1013 = vmatpush1.msra.mxu0 %v977
        %1014 = vmatprep.subr.mxu0 0.0
        %1015 = vmatpush2.msra.mxu0 0.0
        %1016 = vmatprep.subr.mxu0 0.0
        %1017 = vmatpush2.msra.mxu0 0.0
        %1018 = vmatprep.subr.mxu0 0.0
        %1019 = vmatpush2.msra.mxu0 0.0
        %1020 = vmatprep.subr.mxu0 0.0
        %1021 = vmatpush2.msra.mxu0 0.0
        %1022 = vmatprep.subr.mxu0 0.0
        %1023 = vmatpush2.msra.mxu0 0.0
        %1024 = vmatprep.subr.mxu0 0.0
        %1025 = vmatpush2.msra.mxu0 0.0
        %1026 = vmatprep.subr.mxu0 0.0
        %1027 = vmatpush2.msra.mxu0 0.0
        %1028 = vmatprep.subr.mxu0 0.0
        %1029 = vmatpush2.msra.mxu0 0.0
        %1030 = vmatprep.subr.mxu0 0.0
        %1031 = vmatpush2.msra.mxu0 0.0
        %1032 = vmatprep.subr.mxu0 0.0
        %1033 = vmatpush2.msra.mxu0 0.0
        %1034 = vmatprep.subr.mxu0 0.0
        %1035 = vmatpush2.msra.mxu0 0.0
        %1036 = vmatprep.subr.mxu0 0.0
        %1037 = vmatpush2.msra.mxu0 0.0
        %1038 = vmatprep.subr.mxu0 0.0
        %1039 = vmatpush2.msra.mxu0 0.0
        %1040 = vmatprep.subr.mxu0 0.0
        %1041 = vmatpush2.msra.mxu0 0.0
        %1042 = vmatprep.subr.mxu0 0.0
        %1043 = vmatpush2.msra.mxu0 0.0
        %1044 = vmatprep.subr.mxu0 0.0
        %1045 = vmatpush2.msra.mxu0 0.0
        %1046 = vmatprep.mubr.f32.mxu0 0.0
        %1047 = vmatmul.mubr.f32.gmra.mxu0 %v980
        %v1048 = vpop.f32.mrf.mxu0
        %v1049 = vadd.f32 0.0, %v1048
        %v1050 = vpop.f32.mrf.mxu0
        %1051 = vdwg.mxu0
        %v1052 = vmul.f32 %v1049, %v974
        %v1053 = vld [vmem:[#allocation11 + $0x8] sm:$0xff]
        %v1055 = vsel %vm725, %v1052, 0
        %1057 = vmatprep.subr.mxu0 0.0
        %1058 = vmatpush1.msra.mxu0 0.0
        %1059 = vmatprep.subr.mxu0 0.0
        %1060 = vmatpush1.msra.mxu0 0.0
        %1061 = vmatprep.subr.mxu0 0.0
        %1062 = vmatpush1.msra.mxu0 0.0
        %1063 = vmatprep.subr.mxu0 0.0
        %1064 = vmatpush1.msra.mxu0 0.0
        %1065 = vmatprep.subr.mxu0 0.0
        %1066 = vmatpush1.msra.mxu0 0.0
        %1067 = vmatprep.subr.mxu0 0.0
        %1068 = vmatpush1.msra.mxu0 0.0
        %1069 = vmatprep.subr.mxu0 0.0
        %1070 = vmatpush1.msra.mxu0 0.0
        %1071 = vmatprep.subr.mxu0 0.0
        %1072 = vmatpush1.msra.mxu0 0.0
        %1073 = vmatprep.subr.mxu0 0.0
        %1074 = vmatpush1.msra.mxu0 0.0
        %1075 = vmatprep.subr.mxu0 0.0
        %1076 = vmatpush1.msra.mxu0 0.0
        %1077 = vmatprep.subr.mxu0 0.0
        %1078 = vmatpush1.msra.mxu0 0.0
        %1079 = vmatprep.subr.mxu0 0.0
        %1080 = vmatpush1.msra.mxu0 0.0
        %1081 = vmatprep.subr.mxu0 0.0
        %1082 = vmatpush1.msra.mxu0 0.0
        %1083 = vmatprep.subr.mxu0 0.0
        %1084 = vmatpush1.msra.mxu0 0.0
        %1085 = vmatprep.subr.mxu0 0.0
        %1086 = vmatpush1.msra.mxu0 0.0
        %1087 = vmatprep.subr.mxu0 0.0
        %1088 = vmatpush1.msra.mxu0 %v1053
        %1089 = vmatprep.subr.mxu0 0.0
        %1090 = vmatpush2.msra.mxu0 0.0
        %1091 = vmatprep.subr.mxu0 0.0
        %1092 = vmatpush2.msra.mxu0 0.0
        %1093 = vmatprep.subr.mxu0 0.0
        %1094 = vmatpush2.msra.mxu0 0.0
        %1095 = vmatprep.subr.mxu0 0.0
        %1096 = vmatpush2.msra.mxu0 0.0
        %1097 = vmatprep.subr.mxu0 0.0
        %1098 = vmatpush2.msra.mxu0 0.0
        %1099 = vmatprep.subr.mxu0 0.0
        %1100 = vmatpush2.msra.mxu0 0.0
        %1101 = vmatprep.subr.mxu0 0.0
        %1102 = vmatpush2.msra.mxu0 0.0
        %1103 = vmatprep.subr.mxu0 0.0
        %1104 = vmatpush2.msra.mxu0 0.0
        %1105 = vmatprep.subr.mxu0 0.0
        %1106 = vmatpush2.msra.mxu0 0.0
        %1107 = vmatprep.subr.mxu0 0.0
        %1108 = vmatpush2.msra.mxu0 0.0
        %1109 = vmatprep.subr.mxu0 0.0
        %1110 = vmatpush2.msra.mxu0 0.0
        %1111 = vmatprep.subr.mxu0 0.0
        %1112 = vmatpush2.msra.mxu0 0.0
        %1113 = vmatprep.subr.mxu0 0.0
        %1114 = vmatpush2.msra.mxu0 0.0
        %1115 = vmatprep.subr.mxu0 0.0
        %1116 = vmatpush2.msra.mxu0 0.0
        %1117 = vmatprep.subr.mxu0 0.0
        %1118 = vmatpush2.msra.mxu0 0.0
        %1119 = vmatprep.subr.mxu0 0.0
        %1120 = vmatpush2.msra.mxu0 0.0
        %1121 = vmatprep.mubr.f32.mxu0 0.0
        %1122 = vmatmul.mubr.f32.gmra.mxu0 %v1055
        %v1123 = vpop.f32.mrf.mxu0
        %v1124 = vadd.f32 0.0, %v1123
        %v1125 = vpop.f32.mrf.mxu0
        %1126 = vdwg.mxu0
        %v1128 = vsel %vm725, %v885, 0
        %1130 = vmatprep.subr.mxu0 0.0
        %1131 = vmatpush1.msra.mxu0 0.0
        %1132 = vmatprep.subr.mxu0 0.0
        %1133 = vmatpush1.msra.mxu0 0.0
        %1134 = vmatprep.subr.mxu0 0.0
        %1135 = vmatpush1.msra.mxu0 0.0
        %1136 = vmatprep.subr.mxu0 0.0
        %1137 = vmatpush1.msra.mxu0 0.0
        %1138 = vmatprep.subr.mxu0 0.0
        %1139 = vmatpush1.msra.mxu0 0.0
        %1140 = vmatprep.subr.mxu0 0.0
        %1141 = vmatpush1.msra.mxu0 0.0
        %1142 = vmatprep.subr.mxu0 0.0
        %1143 = vmatpush1.msra.mxu0 0.0
        %1144 = vmatprep.subr.mxu0 0.0
        %1145 = vmatpush1.msra.mxu0 0.0
        %1146 = vmatprep.subr.mxu0 0.0
        %1147 = vmatpush1.msra.mxu0 0.0
        %1148 = vmatprep.subr.mxu0 0.0
        %1149 = vmatpush1.msra.mxu0 0.0
        %1150 = vmatprep.subr.mxu0 0.0
        %1151 = vmatpush1.msra.mxu0 0.0
        %1152 = vmatprep.subr.mxu0 0.0
        %1153 = vmatpush1.msra.mxu0 0.0
        %1154 = vmatprep.subr.mxu0 0.0
        %1155 = vmatpush1.msra.mxu0 0.0
        %1156 = vmatprep.subr.mxu0 0.0
        %1157 = vmatpush1.msra.mxu0 0.0
        %1158 = vmatprep.subr.mxu0 0.0
        %1159 = vmatpush1.msra.mxu0 0.0
        %1160 = vmatprep.subr.mxu0 0.0
        %1161 = vmatpush1.msra.mxu0 %v886
        %1162 = vmatprep.subr.mxu0 0.0
        %1163 = vmatpush2.msra.mxu0 0.0
        %1164 = vmatprep.subr.mxu0 0.0
        %1165 = vmatpush2.msra.mxu0 0.0
        %1166 = vmatprep.subr.mxu0 0.0
        %1167 = vmatpush2.msra.mxu0 0.0
        %1168 = vmatprep.subr.mxu0 0.0
        %1169 = vmatpush2.msra.mxu0 0.0
        %1170 = vmatprep.subr.mxu0 0.0
        %1171 = vmatpush2.msra.mxu0 0.0
        %1172 = vmatprep.subr.mxu0 0.0
        %1173 = vmatpush2.msra.mxu0 0.0
        %1174 = vmatprep.subr.mxu0 0.0
        %1175 = vmatpush2.msra.mxu0 0.0
        %1176 = vmatprep.subr.mxu0 0.0
        %1177 = vmatpush2.msra.mxu0 0.0
        %1178 = vmatprep.subr.mxu0 0.0
        %1179 = vmatpush2.msra.mxu0 0.0
        %1180 = vmatprep.subr.mxu0 0.0
        %1181 = vmatpush2.msra.mxu0 0.0
        %1182 = vmatprep.subr.mxu0 0.0
        %1183 = vmatpush2.msra.mxu0 0.0
        %1184 = vmatprep.subr.mxu0 0.0
        %1185 = vmatpush2.msra.mxu0 0.0
        %1186 = vmatprep.subr.mxu0 0.0
        %1187 = vmatpush2.msra.mxu0 0.0
        %1188 = vmatprep.subr.mxu0 0.0
        %1189 = vmatpush2.msra.mxu0 0.0
        %1190 = vmatprep.subr.mxu0 0.0
        %1191 = vmatpush2.msra.mxu0 0.0
        %1192 = vmatprep.subr.mxu0 0.0
        %1193 = vmatpush2.msra.mxu0 0.0
        %1194 = vmatprep.mubr.f32.mxu0 0.0
        %1195 = vmatmul.mubr.f32.gmra.mxu0 %v1128
        %v1196 = vpop.f32.mrf.mxu0
        %v1197 = vadd.f32 %v1124, %v1196
        %v1198 = vpop.f32.mrf.mxu0
        %1199 = vdwg.mxu0
        %1200 = vrot.lane.b32.xlu0 %v724, 112
        %v1201 = vpop.permute.xlu0 %1200
        %1202 = vrot.lane.b32.xlu0 %v639, 112
        %v1203 = vpop.permute.xlu0 %1202
        %v1204 = vsel %vm725, %v1201, 0
        %v1206 = vsel %vm725, %v1203, 0
        %1208 = vmatprep.subr.mxu0 0.0
        %1209 = vmatpush1.xpose.msra.mxu0 0.0
        %1210 = vmatprep.subr.mxu0 0.0
        %1211 = vmatpush1.xpose.msra.mxu0 0.0
        %1212 = vmatprep.subr.mxu0 0.0
        %1213 = vmatpush1.xpose.msra.mxu0 0.0
        %1214 = vmatprep.subr.mxu0 0.0
        %1215 = vmatpush1.xpose.msra.mxu0 0.0
        %1216 = vmatprep.subr.mxu0 0.0
        %1217 = vmatpush1.xpose.msra.mxu0 0.0
        %1218 = vmatprep.subr.mxu0 0.0
        %1219 = vmatpush1.xpose.msra.mxu0 0.0
        %1220 = vmatprep.subr.mxu0 0.0
        %1221 = vmatpush1.xpose.msra.mxu0 0.0
        %1222 = vmatprep.subr.mxu0 0.0
        %1223 = vmatpush1.xpose.msra.mxu0 0.0
        %1224 = vmatprep.subr.mxu0 0.0
        %1225 = vmatpush1.xpose.msra.mxu0 0.0
        %1226 = vmatprep.subr.mxu0 0.0
        %1227 = vmatpush1.xpose.msra.mxu0 0.0
        %1228 = vmatprep.subr.mxu0 0.0
        %1229 = vmatpush1.xpose.msra.mxu0 0.0
        %1230 = vmatprep.subr.mxu0 0.0
        %1231 = vmatpush1.xpose.msra.mxu0 0.0
        %1232 = vmatprep.subr.mxu0 0.0
        %1233 = vmatpush1.xpose.msra.mxu0 0.0
        %1234 = vmatprep.subr.mxu0 0.0
        %1235 = vmatpush1.xpose.msra.mxu0 0.0
        %1236 = vmatprep.subr.mxu0 0.0
        %1237 = vmatpush1.xpose.msra.mxu0 0.0
        %1238 = vmatprep.subr.mxu0 0.0
        %1239 = vmatpush1.xpose.msra.mxu0 %v1206
        %1240 = vmatprep.subr.mxu0 0.0
        %1241 = vmatpush2.xpose.msra.mxu0 0.0
        %1242 = vmatprep.subr.mxu0 0.0
        %1243 = vmatpush2.xpose.msra.mxu0 0.0
        %1244 = vmatprep.subr.mxu0 0.0
        %1245 = vmatpush2.xpose.msra.mxu0 0.0
        %1246 = vmatprep.subr.mxu0 0.0
        %1247 = vmatpush2.xpose.msra.mxu0 0.0
        %1248 = vmatprep.subr.mxu0 0.0
        %1249 = vmatpush2.xpose.msra.mxu0 0.0
        %1250 = vmatprep.subr.mxu0 0.0
        %1251 = vmatpush2.xpose.msra.mxu0 0.0
        %1252 = vmatprep.subr.mxu0 0.0
        %1253 = vmatpush2.xpose.msra.mxu0 0.0
        %1254 = vmatprep.subr.mxu0 0.0
        %1255 = vmatpush2.xpose.msra.mxu0 0.0
        %1256 = vmatprep.subr.mxu0 0.0
        %1257 = vmatpush2.xpose.msra.mxu0 0.0
        %1258 = vmatprep.subr.mxu0 0.0
        %1259 = vmatpush2.xpose.msra.mxu0 0.0
        %1260 = vmatprep.subr.mxu0 0.0
        %1261 = vmatpush2.xpose.msra.mxu0 0.0
        %1262 = vmatprep.subr.mxu0 0.0
        %1263 = vmatpush2.xpose.msra.mxu0 0.0
        %1264 = vmatprep.subr.mxu0 0.0
        %1265 = vmatpush2.xpose.msra.mxu0 0.0
        %1266 = vmatprep.subr.mxu0 0.0
        %1267 = vmatpush2.xpose.msra.mxu0 0.0
        %1268 = vmatprep.subr.mxu0 0.0
        %1269 = vmatpush2.xpose.msra.mxu0 0.0
        %1270 = vmatprep.subr.mxu0 0.0
        %1271 = vmatpush2.xpose.msra.mxu0 0.0
        %1272 = vmatprep.mubr.f32.mxu0 0.0
        %1273 = vmatmul.mubr.f32.gmra.mxu0 %v1204
        %v1274 = vpop.f32.mrf.mxu0
        %v1275 = vadd.f32 0.0, %v1274
        %v1276 = vpop.f32.mrf.mxu0
        %1277 = vdwg.mxu0
        %v1278 = vsel %vm725, %v1275, -inf
        %1279 = vmax.xlane.f32.xlu0 %v1278
        %v1280 = vpop.xlane.xlu0 %1279
        %v1281 = vsub.f32 %v1275, %v1280
        %v1282 = vmul.f32 %v1281, 1.442695
        %v1283 = vpow.pop %v1282
        %v1284 = vsel %vm725, %v1283, 0.0
        %1285 = vadd.xlane.f32.xlu0 %v1284
        %v1286 = vpop.xlane.xlu0 %1285
        %v1287 = vrcp.pop %v1286
        %1288 = vrot.lane.b32.xlu0 %v721, 112
        %v1289 = vpop.permute.xlu0 %1288
        %v1292 = vsel %vm725, %v1283, 0
        %1294 = vmatprep.subr.mxu0 0.0
        %1295 = vmatpush1.msra.mxu0 0.0
        %1296 = vmatprep.subr.mxu0 0.0
        %1297 = vmatpush1.msra.mxu0 0.0
        %1298 = vmatprep.subr.mxu0 0.0
        %1299 = vmatpush1.msra.mxu0 0.0
        %1300 = vmatprep.subr.mxu0 0.0
        %1301 = vmatpush1.msra.mxu0 0.0
        %1302 = vmatprep.subr.mxu0 0.0
        %1303 = vmatpush1.msra.mxu0 0.0
        %1304 = vmatprep.subr.mxu0 0.0
        %1305 = vmatpush1.msra.mxu0 0.0
        %1306 = vmatprep.subr.mxu0 0.0
        %1307 = vmatpush1.msra.mxu0 0.0
        %1308 = vmatprep.subr.mxu0 0.0
        %1309 = vmatpush1.msra.mxu0 0.0
        %1310 = vmatprep.subr.mxu0 0.0
        %1311 = vmatpush1.msra.mxu0 0.0
        %1312 = vmatprep.subr.mxu0 0.0
        %1313 = vmatpush1.msra.mxu0 0.0
        %1314 = vmatprep.subr.mxu0 0.0
        %1315 = vmatpush1.msra.mxu0 0.0
        %1316 = vmatprep.subr.mxu0 0.0
        %1317 = vmatpush1.msra.mxu0 0.0
        %1318 = vmatprep.subr.mxu0 0.0
        %1319 = vmatpush1.msra.mxu0 0.0
        %1320 = vmatprep.subr.mxu0 0.0
        %1321 = vmatpush1.msra.mxu0 0.0
        %1322 = vmatprep.subr.mxu0 0.0
        %1323 = vmatpush1.msra.mxu0 0.0
        %1324 = vmatprep.subr.mxu0 0.0
        %1325 = vmatpush1.msra.mxu0 %v1289
        %1326 = vmatprep.subr.mxu0 0.0
        %1327 = vmatpush2.msra.mxu0 0.0
        %1328 = vmatprep.subr.mxu0 0.0
        %1329 = vmatpush2.msra.mxu0 0.0
        %1330 = vmatprep.subr.mxu0 0.0
        %1331 = vmatpush2.msra.mxu0 0.0
        %1332 = vmatprep.subr.mxu0 0.0
        %1333 = vmatpush2.msra.mxu0 0.0
        %1334 = vmatprep.subr.mxu0 0.0
        %1335 = vmatpush2.msra.mxu0 0.0
        %1336 = vmatprep.subr.mxu0 0.0
        %1337 = vmatpush2.msra.mxu0 0.0
        %1338 = vmatprep.subr.mxu0 0.0
        %1339 = vmatpush2.msra.mxu0 0.0
        %1340 = vmatprep.subr.mxu0 0.0
        %1341 = vmatpush2.msra.mxu0 0.0
        %1342 = vmatprep.subr.mxu0 0.0
        %1343 = vmatpush2.msra.mxu0 0.0
        %1344 = vmatprep.subr.mxu0 0.0
        %1345 = vmatpush2.msra.mxu0 0.0
        %1346 = vmatprep.subr.mxu0 0.0
        %1347 = vmatpush2.msra.mxu0 0.0
        %1348 = vmatprep.subr.mxu0 0.0
        %1349 = vmatpush2.msra.mxu0 0.0
        %1350 = vmatprep.subr.mxu0 0.0
        %1351 = vmatpush2.msra.mxu0 0.0
        %1352 = vmatprep.subr.mxu0 0.0
        %1353 = vmatpush2.msra.mxu0 0.0
        %1354 = vmatprep.subr.mxu0 0.0
        %1355 = vmatpush2.msra.mxu0 0.0
        %1356 = vmatprep.subr.mxu0 0.0
        %1357 = vmatpush2.msra.mxu0 0.0
        %1358 = vmatprep.mubr.f32.mxu0 0.0
        %1359 = vmatmul.mubr.f32.gmra.mxu0 %v1292
        %v1360 = vpop.f32.mrf.mxu0
        %v1361 = vadd.f32 0.0, %v1360
        %v1362 = vpop.f32.mrf.mxu0
        %1363 = vdwg.mxu0
        %v1364 = vmul.f32 %v1361, %v1287
        %v1365 = vld [vmem:[#allocation11 + $0x10] sm:$0xff]
        %v1367 = vsel %vm725, %v1364, 0
        %1369 = vmatprep.subr.mxu0 0.0
        %1370 = vmatpush1.msra.mxu0 0.0
        %1371 = vmatprep.subr.mxu0 0.0
        %1372 = vmatpush1.msra.mxu0 0.0
        %1373 = vmatprep.subr.mxu0 0.0
        %1374 = vmatpush1.msra.mxu0 0.0
        %1375 = vmatprep.subr.mxu0 0.0
        %1376 = vmatpush1.msra.mxu0 0.0
        %1377 = vmatprep.subr.mxu0 0.0
        %1378 = vmatpush1.msra.mxu0 0.0
        %1379 = vmatprep.subr.mxu0 0.0
        %1380 = vmatpush1.msra.mxu0 0.0
        %1381 = vmatprep.subr.mxu0 0.0
        %1382 = vmatpush1.msra.mxu0 0.0
        %1383 = vmatprep.subr.mxu0 0.0
        %1384 = vmatpush1.msra.mxu0 0.0
        %1385 = vmatprep.subr.mxu0 0.0
        %1386 = vmatpush1.msra.mxu0 0.0
        %1387 = vmatprep.subr.mxu0 0.0
        %1388 = vmatpush1.msra.mxu0 0.0
        %1389 = vmatprep.subr.mxu0 0.0
        %1390 = vmatpush1.msra.mxu0 0.0
        %1391 = vmatprep.subr.mxu0 0.0
        %1392 = vmatpush1.msra.mxu0 0.0
        %1393 = vmatprep.subr.mxu0 0.0
        %1394 = vmatpush1.msra.mxu0 0.0
        %1395 = vmatprep.subr.mxu0 0.0
        %1396 = vmatpush1.msra.mxu0 0.0
        %1397 = vmatprep.subr.mxu0 0.0
        %1398 = vmatpush1.msra.mxu0 0.0
        %1399 = vmatprep.subr.mxu0 0.0
        %1400 = vmatpush1.msra.mxu0 %v1365
        %1401 = vmatprep.subr.mxu0 0.0
        %1402 = vmatpush2.msra.mxu0 0.0
        %1403 = vmatprep.subr.mxu0 0.0
        %1404 = vmatpush2.msra.mxu0 0.0
        %1405 = vmatprep.subr.mxu0 0.0
        %1406 = vmatpush2.msra.mxu0 0.0
        %1407 = vmatprep.subr.mxu0 0.0
        %1408 = vmatpush2.msra.mxu0 0.0
        %1409 = vmatprep.subr.mxu0 0.0
        %1410 = vmatpush2.msra.mxu0 0.0
        %1411 = vmatprep.subr.mxu0 0.0
        %1412 = vmatpush2.msra.mxu0 0.0
        %1413 = vmatprep.subr.mxu0 0.0
        %1414 = vmatpush2.msra.mxu0 0.0
        %1415 = vmatprep.subr.mxu0 0.0
        %1416 = vmatpush2.msra.mxu0 0.0
        %1417 = vmatprep.subr.mxu0 0.0
        %1418 = vmatpush2.msra.mxu0 0.0
        %1419 = vmatprep.subr.mxu0 0.0
        %1420 = vmatpush2.msra.mxu0 0.0
        %1421 = vmatprep.subr.mxu0 0.0
        %1422 = vmatpush2.msra.mxu0 0.0
        %1423 = vmatprep.subr.mxu0 0.0
        %1424 = vmatpush2.msra.mxu0 0.0
        %1425 = vmatprep.subr.mxu0 0.0
        %1426 = vmatpush2.msra.mxu0 0.0
        %1427 = vmatprep.subr.mxu0 0.0
        %1428 = vmatpush2.msra.mxu0 0.0
        %1429 = vmatprep.subr.mxu0 0.0
        %1430 = vmatpush2.msra.mxu0 0.0
        %1431 = vmatprep.subr.mxu0 0.0
        %1432 = vmatpush2.msra.mxu0 0.0
        %1433 = vmatprep.mubr.f32.mxu0 0.0
        %1434 = vmatmul.mubr.f32.gmra.mxu0 %v1367
        %v1435 = vpop.f32.mrf.mxu0
        %v1436 = vadd.f32 0.0, %v1435
        %v1437 = vpop.f32.mrf.mxu0
        %1438 = vdwg.mxu0
        %v1439 = vadd.f32 %v1197, %v1436
        %1440 = vrot.lane.b32.xlu0 %v724, 104
        %v1441 = vpop.permute.xlu0 %1440
        %1442 = vrot.lane.b32.xlu0 %v639, 104
        %v1443 = vpop.permute.xlu0 %1442
        %v1444 = vsel %vm725, %v1441, 0
        %v1446 = vsel %vm725, %v1443, 0
        %1448 = vmatprep.subr.mxu0 0.0
        %1449 = vmatpush1.xpose.msra.mxu0 0.0
        %1450 = vmatprep.subr.mxu0 0.0
        %1451 = vmatpush1.xpose.msra.mxu0 0.0
        %1452 = vmatprep.subr.mxu0 0.0
        %1453 = vmatpush1.xpose.msra.mxu0 0.0
        %1454 = vmatprep.subr.mxu0 0.0
        %1455 = vmatpush1.xpose.msra.mxu0 0.0
        %1456 = vmatprep.subr.mxu0 0.0
        %1457 = vmatpush1.xpose.msra.mxu0 0.0
        %1458 = vmatprep.subr.mxu0 0.0
        %1459 = vmatpush1.xpose.msra.mxu0 0.0
        %1460 = vmatprep.subr.mxu0 0.0
        %1461 = vmatpush1.xpose.msra.mxu0 0.0
        %1462 = vmatprep.subr.mxu0 0.0
        %1463 = vmatpush1.xpose.msra.mxu0 0.0
        %1464 = vmatprep.subr.mxu0 0.0
        %1465 = vmatpush1.xpose.msra.mxu0 0.0
        %1466 = vmatprep.subr.mxu0 0.0
        %1467 = vmatpush1.xpose.msra.mxu0 0.0
        %1468 = vmatprep.subr.mxu0 0.0
        %1469 = vmatpush1.xpose.msra.mxu0 0.0
        %1470 = vmatprep.subr.mxu0 0.0
        %1471 = vmatpush1.xpose.msra.mxu0 0.0
        %1472 = vmatprep.subr.mxu0 0.0
        %1473 = vmatpush1.xpose.msra.mxu0 0.0
        %1474 = vmatprep.subr.mxu0 0.0
        %1475 = vmatpush1.xpose.msra.mxu0 0.0
        %1476 = vmatprep.subr.mxu0 0.0
        %1477 = vmatpush1.xpose.msra.mxu0 0.0
        %1478 = vmatprep.subr.mxu0 0.0
        %1479 = vmatpush1.xpose.msra.mxu0 %v1446
        %1480 = vmatprep.subr.mxu0 0.0
        %1481 = vmatpush2.xpose.msra.mxu0 0.0
        %1482 = vmatprep.subr.mxu0 0.0
        %1483 = vmatpush2.xpose.msra.mxu0 0.0
        %1484 = vmatprep.subr.mxu0 0.0
        %1485 = vmatpush2.xpose.msra.mxu0 0.0
        %1486 = vmatprep.subr.mxu0 0.0
        %1487 = vmatpush2.xpose.msra.mxu0 0.0
        %1488 = vmatprep.subr.mxu0 0.0
        %1489 = vmatpush2.xpose.msra.mxu0 0.0
        %1490 = vmatprep.subr.mxu0 0.0
        %1491 = vmatpush2.xpose.msra.mxu0 0.0
        %1492 = vmatprep.subr.mxu0 0.0
        %1493 = vmatpush2.xpose.msra.mxu0 0.0
        %1494 = vmatprep.subr.mxu0 0.0
        %1495 = vmatpush2.xpose.msra.mxu0 0.0
        %1496 = vmatprep.subr.mxu0 0.0
        %1497 = vmatpush2.xpose.msra.mxu0 0.0
        %1498 = vmatprep.subr.mxu0 0.0
        %1499 = vmatpush2.xpose.msra.mxu0 0.0
        %1500 = vmatprep.subr.mxu0 0.0
        %1501 = vmatpush2.xpose.msra.mxu0 0.0
        %1502 = vmatprep.subr.mxu0 0.0
        %1503 = vmatpush2.xpose.msra.mxu0 0.0
        %1504 = vmatprep.subr.mxu0 0.0
        %1505 = vmatpush2.xpose.msra.mxu0 0.0
        %1506 = vmatprep.subr.mxu0 0.0
        %1507 = vmatpush2.xpose.msra.mxu0 0.0
        %1508 = vmatprep.subr.mxu0 0.0
        %1509 = vmatpush2.xpose.msra.mxu0 0.0
        %1510 = vmatprep.subr.mxu0 0.0
        %1511 = vmatpush2.xpose.msra.mxu0 0.0
        %1512 = vmatprep.mubr.f32.mxu0 0.0
        %1513 = vmatmul.mubr.f32.gmra.mxu0 %v1444
        %v1514 = vpop.f32.mrf.mxu0
        %v1515 = vadd.f32 0.0, %v1514
        %v1516 = vpop.f32.mrf.mxu0
        %1517 = vdwg.mxu0
        %v1518 = vsel %vm725, %v1515, -inf
        %1519 = vmax.xlane.f32.xlu0 %v1518
        %v1520 = vpop.xlane.xlu0 %1519
        %v1521 = vsub.f32 %v1515, %v1520
        %v1522 = vmul.f32 %v1521, 1.442695
        %v1523 = vpow.pop %v1522
        %v1524 = vsel %vm725, %v1523, 0.0
        %1525 = vadd.xlane.f32.xlu0 %v1524
        %v1526 = vpop.xlane.xlu0 %1525
        %v1527 = vrcp.pop %v1526
        %1528 = vrot.lane.b32.xlu0 %v721, 104
        %v1529 = vpop.permute.xlu0 %1528
        %v1532 = vsel %vm725, %v1523, 0
        %1534 = vmatprep.subr.mxu0 0.0
        %1535 = vmatpush1.msra.mxu0 0.0
        %1536 = vmatprep.subr.mxu0 0.0
        %1537 = vmatpush1.msra.mxu0 0.0
        %1538 = vmatprep.subr.mxu0 0.0
        %1539 = vmatpush1.msra.mxu0 0.0
        %1540 = vmatprep.subr.mxu0 0.0
        %1541 = vmatpush1.msra.mxu0 0.0
        %1542 = vmatprep.subr.mxu0 0.0
        %1543 = vmatpush1.msra.mxu0 0.0
        %1544 = vmatprep.subr.mxu0 0.0
        %1545 = vmatpush1.msra.mxu0 0.0
        %1546 = vmatprep.subr.mxu0 0.0
        %1547 = vmatpush1.msra.mxu0 0.0
        %1548 = vmatprep.subr.mxu0 0.0
        %1549 = vmatpush1.msra.mxu0 0.0
        %1550 = vmatprep.subr.mxu0 0.0
        %1551 = vmatpush1.msra.mxu0 0.0
        %1552 = vmatprep.subr.mxu0 0.0
        %1553 = vmatpush1.msra.mxu0 0.0
        %1554 = vmatprep.subr.mxu0 0.0
        %1555 = vmatpush1.msra.mxu0 0.0
        %1556 = vmatprep.subr.mxu0 0.0
        %1557 = vmatpush1.msra.mxu0 0.0
        %1558 = vmatprep.subr.mxu0 0.0
        %1559 = vmatpush1.msra.mxu0 0.0
        %1560 = vmatprep.subr.mxu0 0.0
        %1561 = vmatpush1.msra.mxu0 0.0
        %1562 = vmatprep.subr.mxu0 0.0
        %1563 = vmatpush1.msra.mxu0 0.0
        %1564 = vmatprep.subr.mxu0 0.0
        %1565 = vmatpush1.msra.mxu0 %v1529
        %1566 = vmatprep.subr.mxu0 0.0
        %1567 = vmatpush2.msra.mxu0 0.0
        %1568 = vmatprep.subr.mxu0 0.0
        %1569 = vmatpush2.msra.mxu0 0.0
        %1570 = vmatprep.subr.mxu0 0.0
        %1571 = vmatpush2.msra.mxu0 0.0
        %1572 = vmatprep.subr.mxu0 0.0
        %1573 = vmatpush2.msra.mxu0 0.0
        %1574 = vmatprep.subr.mxu0 0.0
        %1575 = vmatpush2.msra.mxu0 0.0
        %1576 = vmatprep.subr.mxu0 0.0
        %1577 = vmatpush2.msra.mxu0 0.0
        %1578 = vmatprep.subr.mxu0 0.0
        %1579 = vmatpush2.msra.mxu0 0.0
        %1580 = vmatprep.subr.mxu0 0.0
        %1581 = vmatpush2.msra.mxu0 0.0
        %1582 = vmatprep.subr.mxu0 0.0
        %1583 = vmatpush2.msra.mxu0 0.0
        %1584 = vmatprep.subr.mxu0 0.0
        %1585 = vmatpush2.msra.mxu0 0.0
        %1586 = vmatprep.subr.mxu0 0.0
        %1587 = vmatpush2.msra.mxu0 0.0
        %1588 = vmatprep.subr.mxu0 0.0
        %1589 = vmatpush2.msra.mxu0 0.0
        %1590 = vmatprep.subr.mxu0 0.0
        %1591 = vmatpush2.msra.mxu0 0.0
        %1592 = vmatprep.subr.mxu0 0.0
        %1593 = vmatpush2.msra.mxu0 0.0
        %1594 = vmatprep.subr.mxu0 0.0
        %1595 = vmatpush2.msra.mxu0 0.0
        %1596 = vmatprep.subr.mxu0 0.0
        %1597 = vmatpush2.msra.mxu0 0.0
        %1598 = vmatprep.mubr.f32.mxu0 0.0
        %1599 = vmatmul.mubr.f32.gmra.mxu0 %v1532
        %v1600 = vpop.f32.mrf.mxu0
        %v1601 = vadd.f32 0.0, %v1600
        %v1602 = vpop.f32.mrf.mxu0
        %1603 = vdwg.mxu0
        %v1604 = vmul.f32 %v1601, %v1527
        %v1605 = vld [vmem:[#allocation11 + $0x18] sm:$0xff]
        %v1607 = vsel %vm725, %v1604, 0
        %1609 = vmatprep.subr.mxu0 0.0
        %1610 = vmatpush1.msra.mxu0 0.0
        %1611 = vmatprep.subr.mxu0 0.0
        %1612 = vmatpush1.msra.mxu0 0.0
        %1613 = vmatprep.subr.mxu0 0.0
        %1614 = vmatpush1.msra.mxu0 0.0
        %1615 = vmatprep.subr.mxu0 0.0
        %1616 = vmatpush1.msra.mxu0 0.0
        %1617 = vmatprep.subr.mxu0 0.0
        %1618 = vmatpush1.msra.mxu0 0.0
        %1619 = vmatprep.subr.mxu0 0.0
        %1620 = vmatpush1.msra.mxu0 0.0
        %1621 = vmatprep.subr.mxu0 0.0
        %1622 = vmatpush1.msra.mxu0 0.0
        %1623 = vmatprep.subr.mxu0 0.0
        %1624 = vmatpush1.msra.mxu0 0.0
        %1625 = vmatprep.subr.mxu0 0.0
        %1626 = vmatpush1.msra.mxu0 0.0
        %1627 = vmatprep.subr.mxu0 0.0
        %1628 = vmatpush1.msra.mxu0 0.0
        %1629 = vmatprep.subr.mxu0 0.0
        %1630 = vmatpush1.msra.mxu0 0.0
        %1631 = vmatprep.subr.mxu0 0.0
        %1632 = vmatpush1.msra.mxu0 0.0
        %1633 = vmatprep.subr.mxu0 0.0
        %1634 = vmatpush1.msra.mxu0 0.0
        %1635 = vmatprep.subr.mxu0 0.0
        %1636 = vmatpush1.msra.mxu0 0.0
        %1637 = vmatprep.subr.mxu0 0.0
        %1638 = vmatpush1.msra.mxu0 0.0
        %1639 = vmatprep.subr.mxu0 0.0
        %1640 = vmatpush1.msra.mxu0 %v1605
        %1641 = vmatprep.subr.mxu0 0.0
        %1642 = vmatpush2.msra.mxu0 0.0
        %1643 = vmatprep.subr.mxu0 0.0
        %1644 = vmatpush2.msra.mxu0 0.0
        %1645 = vmatprep.subr.mxu0 0.0
        %1646 = vmatpush2.msra.mxu0 0.0
        %1647 = vmatprep.subr.mxu0 0.0
        %1648 = vmatpush2.msra.mxu0 0.0
        %1649 = vmatprep.subr.mxu0 0.0
        %1650 = vmatpush2.msra.mxu0 0.0
        %1651 = vmatprep.subr.mxu0 0.0
        %1652 = vmatpush2.msra.mxu0 0.0
        %1653 = vmatprep.subr.mxu0 0.0
        %1654 = vmatpush2.msra.mxu0 0.0
        %1655 = vmatprep.subr.mxu0 0.0
        %1656 = vmatpush2.msra.mxu0 0.0
        %1657 = vmatprep.subr.mxu0 0.0
        %1658 = vmatpush2.msra.mxu0 0.0
        %1659 = vmatprep.subr.mxu0 0.0
        %1660 = vmatpush2.msra.mxu0 0.0
        %1661 = vmatprep.subr.mxu0 0.0
        %1662 = vmatpush2.msra.mxu0 0.0
        %1663 = vmatprep.subr.mxu0 0.0
        %1664 = vmatpush2.msra.mxu0 0.0
        %1665 = vmatprep.subr.mxu0 0.0
        %1666 = vmatpush2.msra.mxu0 0.0
        %1667 = vmatprep.subr.mxu0 0.0
        %1668 = vmatpush2.msra.mxu0 0.0
        %1669 = vmatprep.subr.mxu0 0.0
        %1670 = vmatpush2.msra.mxu0 0.0
        %1671 = vmatprep.subr.mxu0 0.0
        %1672 = vmatpush2.msra.mxu0 0.0
        %1673 = vmatprep.mubr.f32.mxu0 0.0
        %1674 = vmatmul.mubr.f32.gmra.mxu0 %v1607
        %v1675 = vpop.f32.mrf.mxu0
        %v1676 = vadd.f32 0.0, %v1675
        %v1677 = vpop.f32.mrf.mxu0
        %1678 = vdwg.mxu0
        %v1679 = vadd.f32 %v1439, %v1676
        %v1680 = vld [vmem:[%s9] sm:$0x1]
        %v1682 = vlaneseq
        %v1683 = vshrl.u32 %v1682, 7
        %v1684 = vsub.s32 0, %v1683
        %v1685 = vrot.slane %v1680, %v1684
        %v1687 = vadd.f32 %v1679, %v1685
        %vm1688 = vcmask 261120
        %1689 = vst.msk [vmem:[%s469] sm:$0xff] %vm1688, %v1687
        %s1690 = sand.u32 %s260, 1
        %s1691 = scalar_lea.sflag [#allocation4], %s1690
        %s1692 = sand.u32 %s260, 1
        %s1693 = smul.addr %s1692, 8
        %s1694 = scalar_lea.vmem [#allocation13], %s1693
        // Predicated region
        $region85: #{tpu_custom_call.1} parent=59 // pred_check
          %p1695 = pneg %p270
        $region86: #{tpu_custom_call.1} parent=59 // pred_check_branch
          %1697 = sbr.rel (%p1695) target = $region88
        $region87: #{tpu_custom_call.1} parent=59 // pred_region
          %s1699 = ssub.s32 128, 128
          %1700 = vsyncadd %s1691, %s1699
          %s1701 = smul.addr %s32, 128
          %s1702 = scalar_lea.hbm %s10, %s1701
          %s1704 = sshll.u32 %s1694, 4
          %s1705 = int_to_ptr.vmem [resolvable:$true] %s1704
          %1707 = dma.vmem_to_hbm [thread:$0]  %s1705, 128, %s1702, %s1691
        $region88: #{tpu_custom_call.1} parent=59 // pred_fallthru
          _
      $region60: #{tpu_custom_call.1} parent=5 // pred_fallthru
        _
      %p1708 = scmp.le.s32.totalorder 2, %s27
      // Predicated region
      $region89: #{tpu_custom_call.1} parent=5 // pred_check
        %p1709 = pneg %p1708
      $region90: #{tpu_custom_call.1} parent=5 // pred_check_branch
        %1711 = sbr.rel (%p1709) target = $region92
      $region91: #{tpu_custom_call.1} parent=5 // pred_region
        %s1712 = ssub.s32 %s27, 2
        // Predicated region
        $region93: #{tpu_custom_call.1} parent=91 // pred_check
          %p1713 = pneg %p276
        $region94: #{tpu_custom_call.1} parent=91 // pred_check_branch
          %1715 = sbr.rel (%p1713) target = $region96
        $region95: #{tpu_custom_call.1} parent=91 // pred_region
          %s1716 = sand.u32 %s261, 1
          %s1717 = scalar_lea.sflag [#allocation4], %s1716
          %s1718 = sand.u32 %s261, 1
          %s1719 = smul.addr %s1718, 8
          %s1720 = scalar_lea.vmem [#allocation13], %s1719
          %1721 = dma.done %s1717, 128
        $region96: #{tpu_custom_call.1} parent=91 // pred_fallthru
          _
      $region92: #{tpu_custom_call.1} parent=5 // pred_fallthru
        _
    $region6: #{tpu_custom_call.1} parent=1 // loop_footer
      %s31 = sadd.s32 1, %s27
    $region7: #{tpu_custom_call.1} parent=1 // loop_footer_branch
      %26 = sbr.rel target = $region3
    $region8: #{tpu_custom_call.1} parent=1 // loop_exit
      _
    %1722 = vsyncpa [#allocation3], 1
    %s1723 = scalar_lea.sflag [#allocation3], 1
    %1724 = vsyncpa %s1723, 1
    %1725 = vsyncpa [#allocation6], 1
    %s1726 = scalar_lea.sflag [#allocation6], 1
    %1727 = vsyncpa %s1726, 1
    %1728 = vsyncpa [#allocation9], 1
    %1729 = vsyncpa [#allocation12], 1
    %1730 = vsyncpa [#allocation4], 1
    %s1731 = scalar_lea.sflag [#allocation4], 1
    %1732 = vsyncpa %s1731, 1

</llo_original>
